<compile_context>
chip_gen: v5e
topology: v5e:2x2
jax: 0.10.0
libtpu: 0.0.40
codegen_flags: <defaults>
</compile_context>

<pallas_src>
import jax
import jax.numpy as jnp
from jax import lax
from jax.experimental import pallas as pl
from jax.experimental.pallas import tpu as pltpu


def _make_kernel(T, B, H):
    def kernel(
        xcat_ref,                      # (T*B, 2I)  rows: [x[t] | x[T-1-t]]
        wir_ref, wiz_ref, win_ref,     # (2I, 2H)   block-diag input weights per gate
        bir_ref, biz_ref, bin_ref,     # (1, 2H)    folded biases (b_ih+b_hh for r,z; b_in for n)
        whr_ref, whz_ref, whn_ref,     # (2H, 2H)   block-diag recurrent weights per gate
        bhn_ref,                       # (1, 2H)    recurrent bias of n gate
        wfct_ref, wfcb_ref, bfc_ref,   # (H, O), (H, O), (1, O)  final Linear (split halves)
        out_ref,                       # (T*B, O)
        rf_ref, rb_ref,                # scratch (T*B, H): per-time hidden states
    ):
        f32 = jnp.float32

        # ---- Phase 1: batched input projections (both directions at once). ----
        x2d = xcat_ref[...]
        gi_r = jnp.dot(x2d, wir_ref[...], preferred_element_type=f32) + bir_ref[...]
        gi_z = jnp.dot(x2d, wiz_ref[...], preferred_element_type=f32) + biz_ref[...]
        gi_n = jnp.dot(x2d, win_ref[...], preferred_element_type=f32) + bin_ref[...]

        whr = whr_ref[...]
        whz = whz_ref[...]
        whn = whn_ref[...]
        bhn = bhn_ref[...]

        # ---- Phase 2: fused fwd/bwd recurrence on h = [h_fwd | h_bwd]. ----
        # Fully unrolled (T is small & static) so the scheduler overlaps
        # MXU / EUP / VALU work across the short per-step dependency chain.
        h = jnp.zeros((B, 2 * H), f32)
        for i in range(T):
            lo, hi = i * B, (i + 1) * B
            gh_r = jnp.dot(h, whr, preferred_element_type=f32)
            gh_z = jnp.dot(h, whz, preferred_element_type=f32)
            gh_n = jnp.dot(h, whn, preferred_element_type=f32) + bhn
            r = jax.nn.sigmoid(gi_r[lo:hi, :] + gh_r)
            z = jax.nn.sigmoid(gi_z[lo:hi, :] + gh_z)
            n = jnp.tanh(gi_n[lo:hi, :] + r * gh_n)
            h = (1.0 - z) * n + z * h
            # Forward half belongs to time i; backward half to time T-1-i.
            rf_ref[lo:hi, :] = h[:, 0:H]
            j = T - 1 - i
            rb_ref[j * B:(j + 1) * B, :] = h[:, H:2 * H]

        # ---- Phase 3: final Linear as one batched matmul + single store. ----
        out = (jnp.dot(rf_ref[...], wfct_ref[...], preferred_element_type=f32)
               + jnp.dot(rb_ref[...], wfcb_ref[...], preferred_element_type=f32)
               + bfc_ref[...])
        out_ref[...] = out.astype(out_ref.dtype)

    return kernel


def _block_diag(a, b):
    top = jnp.concatenate([a, jnp.zeros((a.shape[0], b.shape[1]), a.dtype)], axis=1)
    bot = jnp.concatenate([jnp.zeros((b.shape[0], a.shape[1]), b.dtype), b], axis=1)
    return jnp.concatenate([top, bot], axis=0)


@jax.jit
def bidirect_gru_pallas(x, params):
    T, B, I = x.shape
    H = params["whh_f"].shape[0]
    O = params["wfc"].shape[1]
    f32 = jnp.float32

    def gate(w, g):  # column-slice gate g of a (*, 3H) matrix / (1, 3H) bias
        return w[:, g * H:(g + 1) * H]

    # Lane-concatenated, time-aligned inputs: row t*B+b = [x[t, b] | x[T-1-t, b]].
    x_rev = jnp.flip(x, axis=0)
    xcat = jnp.concatenate([x, x_rev], axis=-1).reshape(T * B, 2 * I).astype(f32)

    wi = [_block_diag(gate(params["wih_f"], g), gate(params["wih_b"], g)) for g in range(3)]
    wh = [_block_diag(gate(params["whh_f"], g), gate(params["whh_b"], g)) for g in range(3)]

    def bcat(p_f, p_b, g):
        return jnp.concatenate([gate(p_f, g), gate(p_b, g)], axis=1)

    # Fold b_ih + b_hh for the r and z gates; the n gate keeps b_hn separate
    # because it sits inside r * (Whn h + b_hn).
    bi_r = bcat(params["bih_f"], params["bih_b"], 0) + bcat(params["bhh_f"], params["bhh_b"], 0)
    bi_z = bcat(params["bih_f"], params["bih_b"], 1) + bcat(params["bhh_f"], params["bhh_b"], 1)
    bi_n = bcat(params["bih_f"], params["bih_b"], 2)
    bh_n = bcat(params["bhh_f"], params["bhh_b"], 2)

    wfc_top = params["wfc"][0:H, :]
    wfc_bot = params["wfc"][H:2 * H, :]
    bfc = params["bfc"]

    args = (xcat, wi[0], wi[1], wi[2], bi_r, bi_z, bi_n,
            wh[0], wh[1], wh[2], bh_n, wfc_top, wfc_bot, bfc)
    vmem = pl.BlockSpec(memory_space=pltpu.MemorySpace.VMEM)

    out2d = pl.pallas_call(
        _make_kernel(T, B, H),
        out_shape=jax.ShapeDtypeStruct((T * B, O), f32),
        in_specs=[vmem] * len(args),
        out_specs=vmem,
        scratch_shapes=[
            pltpu.VMEM((T * B, H), f32),   # forward hidden states (time-major)
            pltpu.VMEM((T * B, H), f32),   # backward hidden states (time-major)
        ],
        compiler_params=pltpu.CompilerParams(vmem_limit_bytes=32 * 1024 * 1024),
    )(*args)
    return out2d.reshape(T, B, O)


# ---------------- pure-JAX reference (numerical sanity check) ----------------
def _gru_dir_ref(x, wih, whh, bih, bhh):
    H = whh.shape[0]

    def step(h, x_t):
        gi = x_t @ wih + bih[0]
        gh = h @ whh + bhh[0]
        i_r, i_z, i_n = gi[:, :H], gi[:, H:2 * H], gi[:, 2 * H:]
        h_r, h_z, h_n = gh[:, :H], gh[:, H:2 * H], gh[:, 2 * H:]
        r = jax.nn.sigmoid(i_r + h_r)
        z = jax.nn.sigmoid(i_z + h_z)
        n = jnp.tanh(i_n + r * h_n)
        h_new = (1.0 - z) * n + z * h
        return h_new, h_new

    h0 = jnp.zeros((x.shape[1], H), jnp.float32)
    _, hs = lax.scan(step, h0, x)
    return hs


def bidirect_gru_ref(x, p):
    fwd = _gru_dir_ref(x, p["wih_f"], p["whh_f"], p["bih_f"], p["bhh_f"])
    bwd = _gru_dir_ref(x[::-1], p["wih_b"], p["whh_b"], p["bih_b"], p["bhh_b"])[::-1]
    r = jnp.concatenate([fwd, bwd], axis=-1)              # (T, B, 2H)
    T, B, H2 = r.shape
    out = r.reshape(T * B, H2) @ p["wfc"] + p["bfc"][0]
    return out.reshape(T, B, -1)


# ---------------- parameter init (deterministic, PyTorch-style uniform) ------
def init_params(key, input_size, hidden_size, output_size):
    ks = jax.random.split(key, 11)
    k = 1.0 / jnp.sqrt(hidden_size)
    kf = 1.0 / jnp.sqrt(2.0 * hidden_size)
    u = lambda kk, shape, s: jax.random.uniform(kk, shape, jnp.float32, -s, s)
    H3 = 3 * hidden_size
    return {
        "wih_f": u(ks[0], (input_size, H3), k),
        "whh_f": u(ks[1], (hidden_size, H3), k),
        "bih_f": u(ks[2], (1, H3), k),
        "bhh_f": u(ks[3], (1, H3), k),
        "wih_b": u(ks[4], (input_size, H3), k),
        "whh_b": u(ks[5], (hidden_size, H3), k),
        "bih_b": u(ks[6], (1, H3), k),
        "bhh_b": u(ks[7], (1, H3), k),
        "wfc": u(ks[8], (2 * hidden_size, output_size), kf),
        "bfc": u(ks[9], (1, output_size), kf),
    }


if __name__ == "__main__":
    T, B, INPUT, HIDDEN, OUT = 8, 2, 16, 32, 8

    key = jax.random.PRNGKey(0)
    kx, kp = jax.random.split(key)
    x = jax.random.normal(kx, (T, B, INPUT), jnp.float32)
    params = init_params(kp, INPUT, HIDDEN, OUT)

    out = jax.block_until_ready(bidirect_gru_pallas(x, params))
    assert out.shape == (T, B, OUT), out.shape

    ref = jax.block_until_ready(bidirect_gru_ref(x, params))
    assert jnp.allclose(out, ref, atol=2e-3, rtol=2e-3), (
        float(jnp.max(jnp.abs(out - ref))))

    print("KERNEL_OK")
</pallas_src>

<mosaic_0001>
module attributes {stable_mosaic.version = 11 : i64} {
  func.func @kernel(%arg0: memref<16x32xf32, #tpu.memory_space<vmem>>, %arg1: memref<32x64xf32, #tpu.memory_space<vmem>>, %arg2: memref<32x64xf32, #tpu.memory_space<vmem>>, %arg3: memref<32x64xf32, #tpu.memory_space<vmem>>, %arg4: memref<1x64xf32, #tpu.memory_space<vmem>>, %arg5: memref<1x64xf32, #tpu.memory_space<vmem>>, %arg6: memref<1x64xf32, #tpu.memory_space<vmem>>, %arg7: memref<64x64xf32, #tpu.memory_space<vmem>>, %arg8: memref<64x64xf32, #tpu.memory_space<vmem>>, %arg9: memref<64x64xf32, #tpu.memory_space<vmem>>, %arg10: memref<1x64xf32, #tpu.memory_space<vmem>>, %arg11: memref<32x8xf32, #tpu.memory_space<vmem>>, %arg12: memref<32x8xf32, #tpu.memory_space<vmem>>, %arg13: memref<1x8xf32, #tpu.memory_space<vmem>>, %arg14: memref<16x8xf32, #tpu.memory_space<vmem>>, %arg15: memref<16x32xf32, #tpu.memory_space<vmem>>, %arg16: memref<16x32xf32, #tpu.memory_space<vmem>>) attributes {dimension_semantics = [], scalar_prefetch = 0 : i64, scratch_operands = 2 : i64, tpu.core_type = #tpu.core_type<tc>} {
    %c0 = arith.constant 0 : index
    %c0_0 = arith.constant 0 : index
    %0 = vector.load %arg0[%c0, %c0_0] : memref<16x32xf32, #tpu.memory_space<vmem>>, vector<16x32xf32>
    %c0_1 = arith.constant 0 : index
    %c0_2 = arith.constant 0 : index
    %1 = vector.load %arg1[%c0_1, %c0_2] : memref<32x64xf32, #tpu.memory_space<vmem>>, vector<32x64xf32>
    %cst = arith.constant dense<0.000000e+00> : vector<16x64xf32>
    %2 = tpu.matmul %0, %1, %cst {dimension_numbers = #tpu.dot_dimension_numbers<[1], [0], [0], [1], [0, 0, 1, 1], [], []>} : vector<16x32xf32>, vector<32x64xf32>, vector<16x64xf32> -> vector<16x64xf32>
    %c0_3 = arith.constant 0 : index
    %c0_4 = arith.constant 0 : index
    %3 = vector.load %arg4[%c0_3, %c0_4] : memref<1x64xf32, #tpu.memory_space<vmem>>, vector<1x64xf32>
    %4 = vector.broadcast %3 : vector<1x64xf32> to vector<16x64xf32>
    %5 = arith.addf %2, %4 : vector<16x64xf32>
    %c0_5 = arith.constant 0 : index
    %c0_6 = arith.constant 0 : index
    %6 = vector.load %arg2[%c0_5, %c0_6] : memref<32x64xf32, #tpu.memory_space<vmem>>, vector<32x64xf32>
    %cst_7 = arith.constant dense<0.000000e+00> : vector<16x64xf32>
    %7 = tpu.matmul %0, %6, %cst_7 {dimension_numbers = #tpu.dot_dimension_numbers<[1], [0], [0], [1], [0, 0, 1, 1], [], []>} : vector<16x32xf32>, vector<32x64xf32>, vector<16x64xf32> -> vector<16x64xf32>
    %c0_8 = arith.constant 0 : index
    %c0_9 = arith.constant 0 : index
    %8 = vector.load %arg5[%c0_8, %c0_9] : memref<1x64xf32, #tpu.memory_space<vmem>>, vector<1x64xf32>
    %9 = vector.broadcast %8 : vector<1x64xf32> to vector<16x64xf32>
    %10 = arith.addf %7, %9 : vector<16x64xf32>
    %c0_10 = arith.constant 0 : index
    %c0_11 = arith.constant 0 : index
    %11 = vector.load %arg3[%c0_10, %c0_11] : memref<32x64xf32, #tpu.memory_space<vmem>>, vector<32x64xf32>
    %cst_12 = arith.constant dense<0.000000e+00> : vector<16x64xf32>
    %12 = tpu.matmul %0, %11, %cst_12 {dimension_numbers = #tpu.dot_dimension_numbers<[1], [0], [0], [1], [0, 0, 1, 1], [], []>} : vector<16x32xf32>, vector<32x64xf32>, vector<16x64xf32> -> vector<16x64xf32>
    %c0_13 = arith.constant 0 : index
    %c0_14 = arith.constant 0 : index
    %13 = vector.load %arg6[%c0_13, %c0_14] : memref<1x64xf32, #tpu.memory_space<vmem>>, vector<1x64xf32>
    %14 = vector.broadcast %13 : vector<1x64xf32> to vector<16x64xf32>
    %15 = arith.addf %12, %14 : vector<16x64xf32>
    %c0_15 = arith.constant 0 : index
    %c0_16 = arith.constant 0 : index
    %16 = vector.load %arg7[%c0_15, %c0_16] : memref<64x64xf32, #tpu.memory_space<vmem>>, vector<64x64xf32>
    %c0_17 = arith.constant 0 : index
    %c0_18 = arith.constant 0 : index
    %17 = vector.load %arg8[%c0_17, %c0_18] : memref<64x64xf32, #tpu.memory_space<vmem>>, vector<64x64xf32>
    %c0_19 = arith.constant 0 : index
    %c0_20 = arith.constant 0 : index
    %18 = vector.load %arg9[%c0_19, %c0_20] : memref<64x64xf32, #tpu.memory_space<vmem>>, vector<64x64xf32>
    %c0_21 = arith.constant 0 : index
    %c0_22 = arith.constant 0 : index
    %19 = vector.load %arg10[%c0_21, %c0_22] : memref<1x64xf32, #tpu.memory_space<vmem>>, vector<1x64xf32>
    %cst_23 = arith.constant 0.000000e+00 : f32
    %20 = vector.broadcast %cst_23 : f32 to vector<2x64xf32>
    %cst_24 = arith.constant dense<0.000000e+00> : vector<2x64xf32>
    %21 = tpu.matmul %20, %16, %cst_24 {dimension_numbers = #tpu.dot_dimension_numbers<[1], [0], [0], [1], [0, 0, 1, 1], [], []>} : vector<2x64xf32>, vector<64x64xf32>, vector<2x64xf32> -> vector<2x64xf32>
    %cst_25 = arith.constant dense<0.000000e+00> : vector<2x64xf32>
    %22 = tpu.matmul %20, %17, %cst_25 {dimension_numbers = #tpu.dot_dimension_numbers<[1], [0], [0], [1], [0, 0, 1, 1], [], []>} : vector<2x64xf32>, vector<64x64xf32>, vector<2x64xf32> -> vector<2x64xf32>
    %cst_26 = arith.constant dense<0.000000e+00> : vector<2x64xf32>
    %23 = tpu.matmul %20, %18, %cst_26 {dimension_numbers = #tpu.dot_dimension_numbers<[1], [0], [0], [1], [0, 0, 1, 1], [], []>} : vector<2x64xf32>, vector<64x64xf32>, vector<2x64xf32> -> vector<2x64xf32>
    %24 = vector.broadcast %19 : vector<1x64xf32> to vector<2x64xf32>
    %25 = arith.addf %23, %24 : vector<2x64xf32>
    %26 = vector.extract_strided_slice %5 {offsets = [0, 0], sizes = [2, 64], strides = [1, 1]} : vector<16x64xf32> to vector<2x64xf32>
    %27 = arith.addf %26, %21 : vector<2x64xf32>
    %28 = arith.negf %27 : vector<2x64xf32>
    %29 = math.exp %28 : vector<2x64xf32>
    %cst_27 = arith.constant 1.000000e+00 : f32
    %30 = vector.broadcast %cst_27 : f32 to vector<2x64xf32>
    %31 = arith.addf %30, %29 : vector<2x64xf32>
    %32 = arith.divf %30, %31 : vector<2x64xf32>
    %33 = vector.extract_strided_slice %10 {offsets = [0, 0], sizes = [2, 64], strides = [1, 1]} : vector<16x64xf32> to vector<2x64xf32>
    %34 = arith.addf %33, %22 : vector<2x64xf32>
    %35 = arith.negf %34 : vector<2x64xf32>
    %36 = math.exp %35 : vector<2x64xf32>
    %cst_28 = arith.constant 1.000000e+00 : f32
    %37 = vector.broadcast %cst_28 : f32 to vector<2x64xf32>
    %38 = arith.addf %37, %36 : vector<2x64xf32>
    %39 = arith.divf %37, %38 : vector<2x64xf32>
    %40 = vector.extract_strided_slice %15 {offsets = [0, 0], sizes = [2, 64], strides = [1, 1]} : vector<16x64xf32> to vector<2x64xf32>
    %41 = arith.mulf %32, %25 : vector<2x64xf32>
    %42 = arith.addf %40, %41 : vector<2x64xf32>
    %43 = math.tanh %42 : vector<2x64xf32>
    %cst_29 = arith.constant 1.000000e+00 : f32
    %44 = vector.broadcast %cst_29 : f32 to vector<2x64xf32>
    %45 = arith.subf %44, %39 : vector<2x64xf32>
    %46 = arith.mulf %45, %43 : vector<2x64xf32>
    %47 = arith.mulf %39, %20 : vector<2x64xf32>
    %48 = arith.addf %46, %47 : vector<2x64xf32>
    %49 = vector.extract_strided_slice %48 {offsets = [0, 0], sizes = [2, 32], strides = [1, 1]} : vector<2x64xf32> to vector<2x32xf32>
    %c0_30 = arith.constant 0 : index
    %c0_31 = arith.constant 0 : index
    %50 = vector.load %arg15[%c0_30, %c0_31] : memref<16x32xf32, #tpu.memory_space<vmem>>, vector<2x32xf32>
    tpu.vector_store %arg15[%c0_30, %c0_31], %49 {strides = array<i32>} : memref<16x32xf32, #tpu.memory_space<vmem>>, vector<2x32xf32>,
    %51 = vector.extract_strided_slice %48 {offsets = [0, 32], sizes = [2, 32], strides = [1, 1]} : vector<2x64xf32> to vector<2x32xf32>
    %c14 = arith.constant 14 : index
    %c0_32 = arith.constant 0 : index
    %52 = vector.load %arg16[%c14, %c0_32] : memref<16x32xf32, #tpu.memory_space<vmem>>, vector<2x32xf32>
    tpu.vector_store %arg16[%c14, %c0_32], %51 {strides = array<i32>} : memref<16x32xf32, #tpu.memory_space<vmem>>, vector<2x32xf32>,
    %cst_33 = arith.constant dense<0.000000e+00> : vector<2x64xf32>
    %53 = tpu.matmul %48, %16, %cst_33 {dimension_numbers = #tpu.dot_dimension_numbers<[1], [0], [0], [1], [0, 0, 1, 1], [], []>} : vector<2x64xf32>, vector<64x64xf32>, vector<2x64xf32> -> vector<2x64xf32>
    %cst_34 = arith.constant dense<0.000000e+00> : vector<2x64xf32>
    %54 = tpu.matmul %48, %17, %cst_34 {dimension_numbers = #tpu.dot_dimension_numbers<[1], [0], [0], [1], [0, 0, 1, 1], [], []>} : vector<2x64xf32>, vector<64x64xf32>, vector<2x64xf32> -> vector<2x64xf32>
    %cst_35 = arith.constant dense<0.000000e+00> : vector<2x64xf32>
    %55 = tpu.matmul %48, %18, %cst_35 {dimension_numbers = #tpu.dot_dimension_numbers<[1], [0], [0], [1], [0, 0, 1, 1], [], []>} : vector<2x64xf32>, vector<64x64xf32>, vector<2x64xf32> -> vector<2x64xf32>
    %56 = vector.broadcast %19 : vector<1x64xf32> to vector<2x64xf32>
    %57 = arith.addf %55, %56 : vector<2x64xf32>
    %58 = vector.extract_strided_slice %5 {offsets = [2, 0], sizes = [2, 64], strides = [1, 1]} : vector<16x64xf32> to vector<2x64xf32>
    %59 = arith.addf %58, %53 : vector<2x64xf32>
    %60 = arith.negf %59 : vector<2x64xf32>
    %61 = math.exp %60 : vector<2x64xf32>
    %cst_36 = arith.constant 1.000000e+00 : f32
    %62 = vector.broadcast %cst_36 : f32 to vector<2x64xf32>
    %63 = arith.addf %62, %61 : vector<2x64xf32>
    %64 = arith.divf %62, %63 : vector<2x64xf32>
    %65 = vector.extract_strided_slice %10 {offsets = [2, 0], sizes = [2, 64], strides = [1, 1]} : vector<16x64xf32> to vector<2x64xf32>
    %66 = arith.addf %65, %54 : vector<2x64xf32>
    %67 = arith.negf %66 : vector<2x64xf32>
    %68 = math.exp %67 : vector<2x64xf32>
    %cst_37 = arith.constant 1.000000e+00 : f32
    %69 = vector.broadcast %cst_37 : f32 to vector<2x64xf32>
    %70 = arith.addf %69, %68 : vector<2x64xf32>
    %71 = arith.divf %69, %70 : vector<2x64xf32>
    %72 = vector.extract_strided_slice %15 {offsets = [2, 0], sizes = [2, 64], strides = [1, 1]} : vector<16x64xf32> to vector<2x64xf32>
    %73 = arith.mulf %64, %57 : vector<2x64xf32>
    %74 = arith.addf %72, %73 : vector<2x64xf32>
    %75 = math.tanh %74 : vector<2x64xf32>
    %cst_38 = arith.constant 1.000000e+00 : f32
    %76 = vector.broadcast %cst_38 : f32 to vector<2x64xf32>
    %77 = arith.subf %76, %71 : vector<2x64xf32>
    %78 = arith.mulf %77, %75 : vector<2x64xf32>
    %79 = arith.mulf %71, %48 : vector<2x64xf32>
    %80 = arith.addf %78, %79 : vector<2x64xf32>
    %81 = vector.extract_strided_slice %80 {offsets = [0, 0], sizes = [2, 32], strides = [1, 1]} : vector<2x64xf32> to vector<2x32xf32>
    %c2 = arith.constant 2 : index
    %c0_39 = arith.constant 0 : index
    %82 = vector.load %arg15[%c2, %c0_39] : memref<16x32xf32, #tpu.memory_space<vmem>>, vector<2x32xf32>
    tpu.vector_store %arg15[%c2, %c0_39], %81 {strides = array<i32>} : memref<16x32xf32, #tpu.memory_space<vmem>>, vector<2x32xf32>,
    %83 = vector.extract_strided_slice %80 {offsets = [0, 32], sizes = [2, 32], strides = [1, 1]} : vector<2x64xf32> to vector<2x32xf32>
    %c12 = arith.constant 12 : index
    %c0_40 = arith.constant 0 : index
    %84 = vector.load %arg16[%c12, %c0_40] : memref<16x32xf32, #tpu.memory_space<vmem>>, vector<2x32xf32>
    tpu.vector_store %arg16[%c12, %c0_40], %83 {strides = array<i32>} : memref<16x32xf32, #tpu.memory_space<vmem>>, vector<2x32xf32>,
    %cst_41 = arith.constant dense<0.000000e+00> : vector<2x64xf32>
    %85 = tpu.matmul %80, %16, %cst_41 {dimension_numbers = #tpu.dot_dimension_numbers<[1], [0], [0], [1], [0, 0, 1, 1], [], []>} : vector<2x64xf32>, vector<64x64xf32>, vector<2x64xf32> -> vector<2x64xf32>
    %cst_42 = arith.constant dense<0.000000e+00> : vector<2x64xf32>
    %86 = tpu.matmul %80, %17, %cst_42 {dimension_numbers = #tpu.dot_dimension_numbers<[1], [0], [0], [1], [0, 0, 1, 1], [], []>} : vector<2x64xf32>, vector<64x64xf32>, vector<2x64xf32> -> vector<2x64xf32>
    %cst_43 = arith.constant dense<0.000000e+00> : vector<2x64xf32>
    %87 = tpu.matmul %80, %18, %cst_43 {dimension_numbers = #tpu.dot_dimension_numbers<[1], [0], [0], [1], [0, 0, 1, 1], [], []>} : vector<2x64xf32>, vector<64x64xf32>, vector<2x64xf32> -> vector<2x64xf32>
    %88 = vector.broadcast %19 : vector<1x64xf32> to vector<2x64xf32>
    %89 = arith.addf %87, %88 : vector<2x64xf32>
    %90 = vector.extract_strided_slice %5 {offsets = [4, 0], sizes = [2, 64], strides = [1, 1]} : vector<16x64xf32> to vector<2x64xf32>
    %91 = arith.addf %90, %85 : vector<2x64xf32>
    %92 = arith.negf %91 : vector<2x64xf32>
    %93 = math.exp %92 : vector<2x64xf32>
    %cst_44 = arith.constant 1.000000e+00 : f32
    %94 = vector.broadcast %cst_44 : f32 to vector<2x64xf32>
    %95 = arith.addf %94, %93 : vector<2x64xf32>
    %96 = arith.divf %94, %95 : vector<2x64xf32>
    %97 = vector.extract_strided_slice %10 {offsets = [4, 0], sizes = [2, 64], strides = [1, 1]} : vector<16x64xf32> to vector<2x64xf32>
    %98 = arith.addf %97, %86 : vector<2x64xf32>
    %99 = arith.negf %98 : vector<2x64xf32>
    %100 = math.exp %99 : vector<2x64xf32>
    %cst_45 = arith.constant 1.000000e+00 : f32
    %101 = vector.broadcast %cst_45 : f32 to vector<2x64xf32>
    %102 = arith.addf %101, %100 : vector<2x64xf32>
    %103 = arith.divf %101, %102 : vector<2x64xf32>
    %104 = vector.extract_strided_slice %15 {offsets = [4, 0], sizes = [2, 64], strides = [1, 1]} : vector<16x64xf32> to vector<2x64xf32>
    %105 = arith.mulf %96, %89 : vector<2x64xf32>
    %106 = arith.addf %104, %105 : vector<2x64xf32>
    %107 = math.tanh %106 : vector<2x64xf32>
    %cst_46 = arith.constant 1.000000e+00 : f32
    %108 = vector.broadcast %cst_46 : f32 to vector<2x64xf32>
    %109 = arith.subf %108, %103 : vector<2x64xf32>
    %110 = arith.mulf %109, %107 : vector<2x64xf32>
    %111 = arith.mulf %103, %80 : vector<2x64xf32>
    %112 = arith.addf %110, %111 : vector<2x64xf32>
    %113 = vector.extract_strided_slice %112 {offsets = [0, 0], sizes = [2, 32], strides = [1, 1]} : vector<2x64xf32> to vector<2x32xf32>
    %c4 = arith.constant 4 : index
    %c0_47 = arith.constant 0 : index
    %114 = vector.load %arg15[%c4, %c0_47] : memref<16x32xf32, #tpu.memory_space<vmem>>, vector<2x32xf32>
    tpu.vector_store %arg15[%c4, %c0_47], %113 {strides = array<i32>} : memref<16x32xf32, #tpu.memory_space<vmem>>, vector<2x32xf32>,
    %115 = vector.extract_strided_slice %112 {offsets = [0, 32], sizes = [2, 32], strides = [1, 1]} : vector<2x64xf32> to vector<2x32xf32>
    %c10 = arith.constant 10 : index
    %c0_48 = arith.constant 0 : index
    %116 = vector.load %arg16[%c10, %c0_48] : memref<16x32xf32, #tpu.memory_space<vmem>>, vector<2x32xf32>
    tpu.vector_store %arg16[%c10, %c0_48], %115 {strides = array<i32>} : memref<16x32xf32, #tpu.memory_space<vmem>>, vector<2x32xf32>,
    %cst_49 = arith.constant dense<0.000000e+00> : vector<2x64xf32>
    %117 = tpu.matmul %112, %16, %cst_49 {dimension_numbers = #tpu.dot_dimension_numbers<[1], [0], [0], [1], [0, 0, 1, 1], [], []>} : vector<2x64xf32>, vector<64x64xf32>, vector<2x64xf32> -> vector<2x64xf32>
    %cst_50 = arith.constant dense<0.000000e+00> : vector<2x64xf32>
    %118 = tpu.matmul %112, %17, %cst_50 {dimension_numbers = #tpu.dot_dimension_numbers<[1], [0], [0], [1], [0, 0, 1, 1], [], []>} : vector<2x64xf32>, vector<64x64xf32>, vector<2x64xf32> -> vector<2x64xf32>
    %cst_51 = arith.constant dense<0.000000e+00> : vector<2x64xf32>
    %119 = tpu.matmul %112, %18, %cst_51 {dimension_numbers = #tpu.dot_dimension_numbers<[1], [0], [0], [1], [0, 0, 1, 1], [], []>} : vector<2x64xf32>, vector<64x64xf32>, vector<2x64xf32> -> vector<2x64xf32>
    %120 = vector.broadcast %19 : vector<1x64xf32> to vector<2x64xf32>
    %121 = arith.addf %119, %120 : vector<2x64xf32>
    %122 = vector.extract_strided_slice %5 {offsets = [6, 0], sizes = [2, 64], strides = [1, 1]} : vector<16x64xf32> to vector<2x64xf32>
    %123 = arith.addf %122, %117 : vector<2x64xf32>
    %124 = arith.negf %123 : vector<2x64xf32>
    %125 = math.exp %124 : vector<2x64xf32>
    %cst_52 = arith.constant 1.000000e+00 : f32
    %126 = vector.broadcast %cst_52 : f32 to vector<2x64xf32>
    %127 = arith.addf %126, %125 : vector<2x64xf32>
    %128 = arith.divf %126, %127 : vector<2x64xf32>
    %129 = vector.extract_strided_slice %10 {offsets = [6, 0], sizes = [2, 64], strides = [1, 1]} : vector<16x64xf32> to vector<2x64xf32>
    %130 = arith.addf %129, %118 : vector<2x64xf32>
    %131 = arith.negf %130 : vector<2x64xf32>
    %132 = math.exp %131 : vector<2x64xf32>
    %cst_53 = arith.constant 1.000000e+00 : f32
    %133 = vector.broadcast %cst_53 : f32 to vector<2x64xf32>
    %134 = arith.addf %133, %132 : vector<2x64xf32>
    %135 = arith.divf %133, %134 : vector<2x64xf32>
    %136 = vector.extract_strided_slice %15 {offsets = [6, 0], sizes = [2, 64], strides = [1, 1]} : vector<16x64xf32> to vector<2x64xf32>
    %137 = arith.mulf %128, %121 : vector<2x64xf32>
    %138 = arith.addf %136, %137 : vector<2x64xf32>
    %139 = math.tanh %138 : vector<2x64xf32>
    %cst_54 = arith.constant 1.000000e+00 : f32
    %140 = vector.broadcast %cst_54 : f32 to vector<2x64xf32>
    %141 = arith.subf %140, %135 : vector<2x64xf32>
    %142 = arith.mulf %141, %139 : vector<2x64xf32>
    %143 = arith.mulf %135, %112 : vector<2x64xf32>
    %144 = arith.addf %142, %143 : vector<2x64xf32>
    %145 = vector.extract_strided_slice %144 {offsets = [0, 0], sizes = [2, 32], strides = [1, 1]} : vector<2x64xf32> to vector<2x32xf32>
    %c6 = arith.constant 6 : index
    %c0_55 = arith.constant 0 : index
    %146 = vector.load %arg15[%c6, %c0_55] : memref<16x32xf32, #tpu.memory_space<vmem>>, vector<2x32xf32>
    tpu.vector_store %arg15[%c6, %c0_55], %145 {strides = array<i32>} : memref<16x32xf32, #tpu.memory_space<vmem>>, vector<2x32xf32>,
    %147 = vector.extract_strided_slice %144 {offsets = [0, 32], sizes = [2, 32], strides = [1, 1]} : vector<2x64xf32> to vector<2x32xf32>
    %c8 = arith.constant 8 : index
    %c0_56 = arith.constant 0 : index
    %148 = vector.load %arg16[%c8, %c0_56] : memref<16x32xf32, #tpu.memory_space<vmem>>, vector<2x32xf32>
    tpu.vector_store %arg16[%c8, %c0_56], %147 {strides = array<i32>} : memref<16x32xf32, #tpu.memory_space<vmem>>, vector<2x32xf32>,
    %cst_57 = arith.constant dense<0.000000e+00> : vector<2x64xf32>
    %149 = tpu.matmul %144, %16, %cst_57 {dimension_numbers = #tpu.dot_dimension_numbers<[1], [0], [0], [1], [0, 0, 1, 1], [], []>} : vector<2x64xf32>, vector<64x64xf32>, vector<2x64xf32> -> vector<2x64xf32>
    %cst_58 = arith.constant dense<0.000000e+00> : vector<2x64xf32>
    %150 = tpu.matmul %144, %17, %cst_58 {dimension_numbers = #tpu.dot_dimension_numbers<[1], [0], [0], [1], [0, 0, 1, 1], [], []>} : vector<2x64xf32>, vector<64x64xf32>, vector<2x64xf32> -> vector<2x64xf32>
    %cst_59 = arith.constant dense<0.000000e+00> : vector<2x64xf32>
    %151 = tpu.matmul %144, %18, %cst_59 {dimension_numbers = #tpu.dot_dimension_numbers<[1], [0], [0], [1], [0, 0, 1, 1], [], []>} : vector<2x64xf32>, vector<64x64xf32>, vector<2x64xf32> -> vector<2x64xf32>
    %152 = vector.broadcast %19 : vector<1x64xf32> to vector<2x64xf32>
    %153 = arith.addf %151, %152 : vector<2x64xf32>
    %154 = vector.extract_strided_slice %5 {offsets = [8, 0], sizes = [2, 64], strides = [1, 1]} : vector<16x64xf32> to vector<2x64xf32>
    %155 = arith.addf %154, %149 : vector<2x64xf32>
    %156 = arith.negf %155 : vector<2x64xf32>
    %157 = math.exp %156 : vector<2x64xf32>
    %cst_60 = arith.constant 1.000000e+00 : f32
    %158 = vector.broadcast %cst_60 : f32 to vector<2x64xf32>
    %159 = arith.addf %158, %157 : vector<2x64xf32>
    %160 = arith.divf %158, %159 : vector<2x64xf32>
    %161 = vector.extract_strided_slice %10 {offsets = [8, 0], sizes = [2, 64], strides = [1, 1]} : vector<16x64xf32> to vector<2x64xf32>
    %162 = arith.addf %161, %150 : vector<2x64xf32>
    %163 = arith.negf %162 : vector<2x64xf32>
    %164 = math.exp %163 : vector<2x64xf32>
    %cst_61 = arith.constant 1.000000e+00 : f32
    %165 = vector.broadcast %cst_61 : f32 to vector<2x64xf32>
    %166 = arith.addf %165, %164 : vector<2x64xf32>
    %167 = arith.divf %165, %166 : vector<2x64xf32>
    %168 = vector.extract_strided_slice %15 {offsets = [8, 0], sizes = [2, 64], strides = [1, 1]} : vector<16x64xf32> to vector<2x64xf32>
    %169 = arith.mulf %160, %153 : vector<2x64xf32>
    %170 = arith.addf %168, %169 : vector<2x64xf32>
    %171 = math.tanh %170 : vector<2x64xf32>
    %cst_62 = arith.constant 1.000000e+00 : f32
    %172 = vector.broadcast %cst_62 : f32 to vector<2x64xf32>
    %173 = arith.subf %172, %167 : vector<2x64xf32>
    %174 = arith.mulf %173, %171 : vector<2x64xf32>
    %175 = arith.mulf %167, %144 : vector<2x64xf32>
    %176 = arith.addf %174, %175 : vector<2x64xf32>
    %177 = vector.extract_strided_slice %176 {offsets = [0, 0], sizes = [2, 32], strides = [1, 1]} : vector<2x64xf32> to vector<2x32xf32>
    %c8_63 = arith.constant 8 : index
    %c0_64 = arith.constant 0 : index
    %178 = vector.load %arg15[%c8_63, %c0_64] : memref<16x32xf32, #tpu.memory_space<vmem>>, vector<2x32xf32>
    tpu.vector_store %arg15[%c8_63, %c0_64], %177 {strides = array<i32>} : memref<16x32xf32, #tpu.memory_space<vmem>>, vector<2x32xf32>,
    %179 = vector.extract_strided_slice %176 {offsets = [0, 32], sizes = [2, 32], strides = [1, 1]} : vector<2x64xf32> to vector<2x32xf32>
    %c6_65 = arith.constant 6 : index
    %c0_66 = arith.constant 0 : index
    %180 = vector.load %arg16[%c6_65, %c0_66] : memref<16x32xf32, #tpu.memory_space<vmem>>, vector<2x32xf32>
    tpu.vector_store %arg16[%c6_65, %c0_66], %179 {strides = array<i32>} : memref<16x32xf32, #tpu.memory_space<vmem>>, vector<2x32xf32>,
    %cst_67 = arith.constant dense<0.000000e+00> : vector<2x64xf32>
    %181 = tpu.matmul %176, %16, %cst_67 {dimension_numbers = #tpu.dot_dimension_numbers<[1], [0], [0], [1], [0, 0, 1, 1], [], []>} : vector<2x64xf32>, vector<64x64xf32>, vector<2x64xf32> -> vector<2x64xf32>
    %cst_68 = arith.constant dense<0.000000e+00> : vector<2x64xf32>
    %182 = tpu.matmul %176, %17, %cst_68 {dimension_numbers = #tpu.dot_dimension_numbers<[1], [0], [0], [1], [0, 0, 1, 1], [], []>} : vector<2x64xf32>, vector<64x64xf32>, vector<2x64xf32> -> vector<2x64xf32>
    %cst_69 = arith.constant dense<0.000000e+00> : vector<2x64xf32>
    %183 = tpu.matmul %176, %18, %cst_69 {dimension_numbers = #tpu.dot_dimension_numbers<[1], [0], [0], [1], [0, 0, 1, 1], [], []>} : vector<2x64xf32>, vector<64x64xf32>, vector<2x64xf32> -> vector<2x64xf32>
    %184 = vector.broadcast %19 : vector<1x64xf32> to vector<2x64xf32>
    %185 = arith.addf %183, %184 : vector<2x64xf32>
    %186 = vector.extract_strided_slice %5 {offsets = [10, 0], sizes = [2, 64], strides = [1, 1]} : vector<16x64xf32> to vector<2x64xf32>
    %187 = arith.addf %186, %181 : vector<2x64xf32>
    %188 = arith.negf %187 : vector<2x64xf32>
    %189 = math.exp %188 : vector<2x64xf32>
    %cst_70 = arith.constant 1.000000e+00 : f32
    %190 = vector.broadcast %cst_70 : f32 to vector<2x64xf32>
    %191 = arith.addf %190, %189 : vector<2x64xf32>
    %192 = arith.divf %190, %191 : vector<2x64xf32>
    %193 = vector.extract_strided_slice %10 {offsets = [10, 0], sizes = [2, 64], strides = [1, 1]} : vector<16x64xf32> to vector<2x64xf32>
    %194 = arith.addf %193, %182 : vector<2x64xf32>
    %195 = arith.negf %194 : vector<2x64xf32>
    %196 = math.exp %195 : vector<2x64xf32>
    %cst_71 = arith.constant 1.000000e+00 : f32
    %197 = vector.broadcast %cst_71 : f32 to vector<2x64xf32>
    %198 = arith.addf %197, %196 : vector<2x64xf32>
    %199 = arith.divf %197, %198 : vector<2x64xf32>
    %200 = vector.extract_strided_slice %15 {offsets = [10, 0], sizes = [2, 64], strides = [1, 1]} : vector<16x64xf32> to vector<2x64xf32>
    %201 = arith.mulf %192, %185 : vector<2x64xf32>
    %202 = arith.addf %200, %201 : vector<2x64xf32>
    %203 = math.tanh %202 : vector<2x64xf32>
    %cst_72 = arith.constant 1.000000e+00 : f32
    %204 = vector.broadcast %cst_72 : f32 to vector<2x64xf32>
    %205 = arith.subf %204, %199 : vector<2x64xf32>
    %206 = arith.mulf %205, %203 : vector<2x64xf32>
    %207 = arith.mulf %199, %176 : vector<2x64xf32>
    %208 = arith.addf %206, %207 : vector<2x64xf32>
    %209 = vector.extract_strided_slice %208 {offsets = [0, 0], sizes = [2, 32], strides = [1, 1]} : vector<2x64xf32> to vector<2x32xf32>
    %c10_73 = arith.constant 10 : index
    %c0_74 = arith.constant 0 : index
    %210 = vector.load %arg15[%c10_73, %c0_74] : memref<16x32xf32, #tpu.memory_space<vmem>>, vector<2x32xf32>
    tpu.vector_store %arg15[%c10_73, %c0_74], %209 {strides = array<i32>} : memref<16x32xf32, #tpu.memory_space<vmem>>, vector<2x32xf32>,
    %211 = vector.extract_strided_slice %208 {offsets = [0, 32], sizes = [2, 32], strides = [1, 1]} : vector<2x64xf32> to vector<2x32xf32>
    %c4_75 = arith.constant 4 : index
    %c0_76 = arith.constant 0 : index
    %212 = vector.load %arg16[%c4_75, %c0_76] : memref<16x32xf32, #tpu.memory_space<vmem>>, vector<2x32xf32>
    tpu.vector_store %arg16[%c4_75, %c0_76], %211 {strides = array<i32>} : memref<16x32xf32, #tpu.memory_space<vmem>>, vector<2x32xf32>,
    %cst_77 = arith.constant dense<0.000000e+00> : vector<2x64xf32>
    %213 = tpu.matmul %208, %16, %cst_77 {dimension_numbers = #tpu.dot_dimension_numbers<[1], [0], [0], [1], [0, 0, 1, 1], [], []>} : vector<2x64xf32>, vector<64x64xf32>, vector<2x64xf32> -> vector<2x64xf32>
    %cst_78 = arith.constant dense<0.000000e+00> : vector<2x64xf32>
    %214 = tpu.matmul %208, %17, %cst_78 {dimension_numbers = #tpu.dot_dimension_numbers<[1], [0], [0], [1], [0, 0, 1, 1], [], []>} : vector<2x64xf32>, vector<64x64xf32>, vector<2x64xf32> -> vector<2x64xf32>
    %cst_79 = arith.constant dense<0.000000e+00> : vector<2x64xf32>
    %215 = tpu.matmul %208, %18, %cst_79 {dimension_numbers = #tpu.dot_dimension_numbers<[1], [0], [0], [1], [0, 0, 1, 1], [], []>} : vector<2x64xf32>, vector<64x64xf32>, vector<2x64xf32> -> vector<2x64xf32>
    %216 = vector.broadcast %19 : vector<1x64xf32> to vector<2x64xf32>
    %217 = arith.addf %215, %216 : vector<2x64xf32>
    %218 = vector.extract_strided_slice %5 {offsets = [12, 0], sizes = [2, 64], strides = [1, 1]} : vector<16x64xf32> to vector<2x64xf32>
    %219 = arith.addf %218, %213 : vector<2x64xf32>
    %220 = arith.negf %219 : vector<2x64xf32>
    %221 = math.exp %220 : vector<2x64xf32>
    %cst_80 = arith.constant 1.000000e+00 : f32
    %222 = vector.broadcast %cst_80 : f32 to vector<2x64xf32>
    %223 = arith.addf %222, %221 : vector<2x64xf32>
    %224 = arith.divf %222, %223 : vector<2x64xf32>
    %225 = vector.extract_strided_slice %10 {offsets = [12, 0], sizes = [2, 64], strides = [1, 1]} : vector<16x64xf32> to vector<2x64xf32>
    %226 = arith.addf %225, %214 : vector<2x64xf32>
    %227 = arith.negf %226 : vector<2x64xf32>
    %228 = math.exp %227 : vector<2x64xf32>
    %cst_81 = arith.constant 1.000000e+00 : f32
    %229 = vector.broadcast %cst_81 : f32 to vector<2x64xf32>
    %230 = arith.addf %229, %228 : vector<2x64xf32>
    %231 = arith.divf %229, %230 : vector<2x64xf32>
    %232 = vector.extract_strided_slice %15 {offsets = [12, 0], sizes = [2, 64], strides = [1, 1]} : vector<16x64xf32> to vector<2x64xf32>
    %233 = arith.mulf %224, %217 : vector<2x64xf32>
    %234 = arith.addf %232, %233 : vector<2x64xf32>
    %235 = math.tanh %234 : vector<2x64xf32>
    %cst_82 = arith.constant 1.000000e+00 : f32
    %236 = vector.broadcast %cst_82 : f32 to vector<2x64xf32>
    %237 = arith.subf %236, %231 : vector<2x64xf32>
    %238 = arith.mulf %237, %235 : vector<2x64xf32>
    %239 = arith.mulf %231, %208 : vector<2x64xf32>
    %240 = arith.addf %238, %239 : vector<2x64xf32>
    %241 = vector.extract_strided_slice %240 {offsets = [0, 0], sizes = [2, 32], strides = [1, 1]} : vector<2x64xf32> to vector<2x32xf32>
    %c12_83 = arith.constant 12 : index
    %c0_84 = arith.constant 0 : index
    %242 = vector.load %arg15[%c12_83, %c0_84] : memref<16x32xf32, #tpu.memory_space<vmem>>, vector<2x32xf32>
    tpu.vector_store %arg15[%c12_83, %c0_84], %241 {strides = array<i32>} : memref<16x32xf32, #tpu.memory_space<vmem>>, vector<2x32xf32>,
    %243 = vector.extract_strided_slice %240 {offsets = [0, 32], sizes = [2, 32], strides = [1, 1]} : vector<2x64xf32> to vector<2x32xf32>
    %c2_85 = arith.constant 2 : index
    %c0_86 = arith.constant 0 : index
    %244 = vector.load %arg16[%c2_85, %c0_86] : memref<16x32xf32, #tpu.memory_space<vmem>>, vector<2x32xf32>
    tpu.vector_store %arg16[%c2_85, %c0_86], %243 {strides = array<i32>} : memref<16x32xf32, #tpu.memory_space<vmem>>, vector<2x32xf32>,
    %cst_87 = arith.constant dense<0.000000e+00> : vector<2x64xf32>
    %245 = tpu.matmul %240, %16, %cst_87 {dimension_numbers = #tpu.dot_dimension_numbers<[1], [0], [0], [1], [0, 0, 1, 1], [], []>} : vector<2x64xf32>, vector<64x64xf32>, vector<2x64xf32> -> vector<2x64xf32>
    %cst_88 = arith.constant dense<0.000000e+00> : vector<2x64xf32>
    %246 = tpu.matmul %240, %17, %cst_88 {dimension_numbers = #tpu.dot_dimension_numbers<[1], [0], [0], [1], [0, 0, 1, 1], [], []>} : vector<2x64xf32>, vector<64x64xf32>, vector<2x64xf32> -> vector<2x64xf32>
    %cst_89 = arith.constant dense<0.000000e+00> : vector<2x64xf32>
    %247 = tpu.matmul %240, %18, %cst_89 {dimension_numbers = #tpu.dot_dimension_numbers<[1], [0], [0], [1], [0, 0, 1, 1], [], []>} : vector<2x64xf32>, vector<64x64xf32>, vector<2x64xf32> -> vector<2x64xf32>
    %248 = vector.broadcast %19 : vector<1x64xf32> to vector<2x64xf32>
    %249 = arith.addf %247, %248 : vector<2x64xf32>
    %250 = vector.extract_strided_slice %5 {offsets = [14, 0], sizes = [2, 64], strides = [1, 1]} : vector<16x64xf32> to vector<2x64xf32>
    %251 = arith.addf %250, %245 : vector<2x64xf32>
    %252 = arith.negf %251 : vector<2x64xf32>
    %253 = math.exp %252 : vector<2x64xf32>
    %cst_90 = arith.constant 1.000000e+00 : f32
    %254 = vector.broadcast %cst_90 : f32 to vector<2x64xf32>
    %255 = arith.addf %254, %253 : vector<2x64xf32>
    %256 = arith.divf %254, %255 : vector<2x64xf32>
    %257 = vector.extract_strided_slice %10 {offsets = [14, 0], sizes = [2, 64], strides = [1, 1]} : vector<16x64xf32> to vector<2x64xf32>
    %258 = arith.addf %257, %246 : vector<2x64xf32>
    %259 = arith.negf %258 : vector<2x64xf32>
    %260 = math.exp %259 : vector<2x64xf32>
    %cst_91 = arith.constant 1.000000e+00 : f32
    %261 = vector.broadcast %cst_91 : f32 to vector<2x64xf32>
    %262 = arith.addf %261, %260 : vector<2x64xf32>
    %263 = arith.divf %261, %262 : vector<2x64xf32>
    %264 = vector.extract_strided_slice %15 {offsets = [14, 0], sizes = [2, 64], strides = [1, 1]} : vector<16x64xf32> to vector<2x64xf32>
    %265 = arith.mulf %256, %249 : vector<2x64xf32>
    %266 = arith.addf %264, %265 : vector<2x64xf32>
    %267 = math.tanh %266 : vector<2x64xf32>
    %cst_92 = arith.constant 1.000000e+00 : f32
    %268 = vector.broadcast %cst_92 : f32 to vector<2x64xf32>
    %269 = arith.subf %268, %263 : vector<2x64xf32>
    %270 = arith.mulf %269, %267 : vector<2x64xf32>
    %271 = arith.mulf %263, %240 : vector<2x64xf32>
    %272 = arith.addf %270, %271 : vector<2x64xf32>
    %273 = vector.extract_strided_slice %272 {offsets = [0, 0], sizes = [2, 32], strides = [1, 1]} : vector<2x64xf32> to vector<2x32xf32>
    %c14_93 = arith.constant 14 : index
    %c0_94 = arith.constant 0 : index
    %274 = vector.load %arg15[%c14_93, %c0_94] : memref<16x32xf32, #tpu.memory_space<vmem>>, vector<2x32xf32>
    tpu.vector_store %arg15[%c14_93, %c0_94], %273 {strides = array<i32>} : memref<16x32xf32, #tpu.memory_space<vmem>>, vector<2x32xf32>,
    %275 = vector.extract_strided_slice %272 {offsets = [0, 32], sizes = [2, 32], strides = [1, 1]} : vector<2x64xf32> to vector<2x32xf32>
    %c0_95 = arith.constant 0 : index
    %c0_96 = arith.constant 0 : index
    %276 = vector.load %arg16[%c0_95, %c0_96] : memref<16x32xf32, #tpu.memory_space<vmem>>, vector<2x32xf32>
    tpu.vector_store %arg16[%c0_95, %c0_96], %275 {strides = array<i32>} : memref<16x32xf32, #tpu.memory_space<vmem>>, vector<2x32xf32>,
    %c0_97 = arith.constant 0 : index
    %c0_98 = arith.constant 0 : index
    %277 = vector.load %arg15[%c0_97, %c0_98] : memref<16x32xf32, #tpu.memory_space<vmem>>, vector<16x32xf32>
    %c0_99 = arith.constant 0 : index
    %c0_100 = arith.constant 0 : index
    %278 = vector.load %arg11[%c0_99, %c0_100] : memref<32x8xf32, #tpu.memory_space<vmem>>, vector<32x8xf32>
    %cst_101 = arith.constant dense<0.000000e+00> : vector<16x8xf32>
    %279 = tpu.matmul %277, %278, %cst_101 {dimension_numbers = #tpu.dot_dimension_numbers<[1], [0], [0], [1], [0, 0, 1, 1], [], []>} : vector<16x32xf32>, vector<32x8xf32>, vector<16x8xf32> -> vector<16x8xf32>
    %c0_102 = arith.constant 0 : index
    %c0_103 = arith.constant 0 : index
    %280 = vector.load %arg16[%c0_102, %c0_103] : memref<16x32xf32, #tpu.memory_space<vmem>>, vector<16x32xf32>
    %c0_104 = arith.constant 0 : index
    %c0_105 = arith.constant 0 : index
    %281 = vector.load %arg12[%c0_104, %c0_105] : memref<32x8xf32, #tpu.memory_space<vmem>>, vector<32x8xf32>
    %cst_106 = arith.constant dense<0.000000e+00> : vector<16x8xf32>
    %282 = tpu.matmul %280, %281, %cst_106 {dimension_numbers = #tpu.dot_dimension_numbers<[1], [0], [0], [1], [0, 0, 1, 1], [], []>} : vector<16x32xf32>, vector<32x8xf32>, vector<16x8xf32> -> vector<16x8xf32>
    %283 = arith.addf %279, %282 : vector<16x8xf32>
    %c0_107 = arith.constant 0 : index
    %c0_108 = arith.constant 0 : index
    %284 = vector.load %arg13[%c0_107, %c0_108] : memref<1x8xf32, #tpu.memory_space<vmem>>, vector<1x8xf32>
    %285 = vector.broadcast %284 : vector<1x8xf32> to vector<16x8xf32>
    %286 = arith.addf %283, %285 : vector<16x8xf32>
    %c0_109 = arith.constant 0 : index
    %c0_110 = arith.constant 0 : index
    %287 = vector.load %arg14[%c0_109, %c0_110] : memref<16x8xf32, #tpu.memory_space<vmem>>, vector<16x8xf32>
    tpu.vector_store %arg14[%c0_109, %c0_110], %286 {strides = array<i32>} : memref<16x8xf32, #tpu.memory_space<vmem>>, vector<16x8xf32>,
    return
  }
}

</mosaic_0001>

<llo_original>
// kernel: bidirect_gru_pallas.1
$region0: #{bidirect_gru_pallas.1}
  #allocation0 [shape = 'u32[]', space=smem, size = 0x4, offset = 0x4, fixed_abs, tag = 'smem constant byte address 0x4 - core index']
  #allocation1 [shape = 'u32[72,128]{1,0:T(1,128)}', space=vmem, size = 0x9000, scoped, tag = 'internal scratch']
  #allocation2 [shape = 'f32[16,32]{1,0:T(8,128)}', space=vmem, size = 0x2000, scoped, tag = 'scratch operand']
  #allocation3 [shape = 'f32[16,32]{1,0:T(8,128)}', space=vmem, size = 0x2000, scoped, tag = 'scratch operand']
  %s0 = inlined_call_operand.vmem [shape: f32[16,32], index: 0, kind: input, shape index: {}]
  %s1 = inlined_call_operand.vmem [shape: f32[32,64], index: 1, kind: input, shape index: {}]
  %s2 = inlined_call_operand.vmem [shape: f32[32,64], index: 2, kind: input, shape index: {}]
  %s3 = inlined_call_operand.vmem [shape: f32[32,64], index: 3, kind: input, shape index: {}]
  %s4 = inlined_call_operand.vmem [shape: f32[1,64], index: 4, kind: input, shape index: {}]
  %s5 = inlined_call_operand.vmem [shape: f32[1,64], index: 5, kind: input, shape index: {}]
  %s6 = inlined_call_operand.vmem [shape: f32[1,64], index: 6, kind: input, shape index: {}]
  %s7 = inlined_call_operand.vmem [shape: f32[64,64], index: 7, kind: input, shape index: {}]
  %s8 = inlined_call_operand.vmem [shape: f32[64,64], index: 8, kind: input, shape index: {}]
  %s9 = inlined_call_operand.vmem [shape: f32[64,64], index: 9, kind: input, shape index: {}]
  %s10 = inlined_call_operand.vmem [shape: f32[1,64], index: 10, kind: input, shape index: {}]
  %s11 = inlined_call_operand.vmem [shape: f32[32,8], index: 11, kind: input, shape index: {}]
  %s12 = inlined_call_operand.vmem [shape: f32[32,8], index: 12, kind: input, shape index: {}]
  %s13 = inlined_call_operand.vmem [shape: f32[1,8], index: 13, kind: input, shape index: {}]
  %s14 = inlined_call_operand.hbm [shape: f32[16,8], index: 14, kind: output, shape index: {}]
  %s15 = sld [smem:[#allocation0]]
  $region66: #{bidirect_gru_pallas.1} parent=0
    _
  %s17 = ssub.s32 1, %s15
  %s18 = scalar_select 0, %s17, %s15
  $region1: #{bidirect_gru_pallas.1} parent=0
    #allocation4 [shape = 'u8[8192]{0}', space=vmem, size = 0x2000, scoped, tag = 'output window, operand 0, single buffered']
    #allocation5 [shape = 's32[1]{0}', space=sflag, size = 0x4, scoped, tag = 'scoped memory for bidirect_gru_pallas.1']
    %19 = vsyncpa [#allocation5], 0
    // Predicated region
    $region2: #{bidirect_gru_pallas.1} parent=1 // pred_check
      _
    $region3: #{bidirect_gru_pallas.1} parent=1 // pred_check_branch
      %21 = sbr.rel (0) target = $region5
    $region4: #{bidirect_gru_pallas.1} parent=1 // pred_region
      _
    $region5: #{bidirect_gru_pallas.1} parent=1 // pred_fallthru
      _
    // Predicated region
    $region6: #{bidirect_gru_pallas.1} parent=1 // pred_check
      _
    $region7: #{bidirect_gru_pallas.1} parent=1 // pred_check_branch
      %23 = sbr.rel (0) target = $region9
    $region8: #{bidirect_gru_pallas.1} parent=1 // pred_region
      _
    $region9: #{bidirect_gru_pallas.1} parent=1 // pred_fallthru
      _
    // Predicated region
    $region10: #{bidirect_gru_pallas.1} parent=1 // pred_check
      _
    $region11: #{bidirect_gru_pallas.1} parent=1 // pred_check_branch
      %25 = sbr.rel (0) target = $region13
    $region12: #{bidirect_gru_pallas.1} parent=1 // pred_region
      _
    $region13: #{bidirect_gru_pallas.1} parent=1 // pred_fallthru
      _
    // Predicated region
    $region14: #{bidirect_gru_pallas.1} parent=1 // pred_check
      _
    $region15: #{bidirect_gru_pallas.1} parent=1 // pred_check_branch
      %27 = sbr.rel (0) target = $region17
    $region16: #{bidirect_gru_pallas.1} parent=1 // pred_region
      _
    $region17: #{bidirect_gru_pallas.1} parent=1 // pred_fallthru
      _
    // Predicated region
    $region18: #{bidirect_gru_pallas.1} parent=1 // pred_check
      _
    $region19: #{bidirect_gru_pallas.1} parent=1 // pred_check_branch
      %29 = sbr.rel (0) target = $region21
    $region20: #{bidirect_gru_pallas.1} parent=1 // pred_region
      _
    $region21: #{bidirect_gru_pallas.1} parent=1 // pred_fallthru
      _
    // Predicated region
    $region22: #{bidirect_gru_pallas.1} parent=1 // pred_check
      _
    $region23: #{bidirect_gru_pallas.1} parent=1 // pred_check_branch
      %31 = sbr.rel (0) target = $region25
    $region24: #{bidirect_gru_pallas.1} parent=1 // pred_region
      _
    $region25: #{bidirect_gru_pallas.1} parent=1 // pred_fallthru
      _
    // Predicated region
    $region26: #{bidirect_gru_pallas.1} parent=1 // pred_check
      _
    $region27: #{bidirect_gru_pallas.1} parent=1 // pred_check_branch
      %33 = sbr.rel (0) target = $region29
    $region28: #{bidirect_gru_pallas.1} parent=1 // pred_region
      _
    $region29: #{bidirect_gru_pallas.1} parent=1 // pred_fallthru
      _
    // Predicated region
    $region30: #{bidirect_gru_pallas.1} parent=1 // pred_check
      _
    $region31: #{bidirect_gru_pallas.1} parent=1 // pred_check_branch
      %35 = sbr.rel (0) target = $region33
    $region32: #{bidirect_gru_pallas.1} parent=1 // pred_region
      _
    $region33: #{bidirect_gru_pallas.1} parent=1 // pred_fallthru
      _
    // Predicated region
    $region34: #{bidirect_gru_pallas.1} parent=1 // pred_check
      _
    $region35: #{bidirect_gru_pallas.1} parent=1 // pred_check_branch
      %37 = sbr.rel (0) target = $region37
    $region36: #{bidirect_gru_pallas.1} parent=1 // pred_region
      _
    $region37: #{bidirect_gru_pallas.1} parent=1 // pred_fallthru
      _
    // Predicated region
    $region38: #{bidirect_gru_pallas.1} parent=1 // pred_check
      _
    $region39: #{bidirect_gru_pallas.1} parent=1 // pred_check_branch
      %39 = sbr.rel (0) target = $region41
    $region40: #{bidirect_gru_pallas.1} parent=1 // pred_region
      _
    $region41: #{bidirect_gru_pallas.1} parent=1 // pred_fallthru
      _
    // Predicated region
    $region42: #{bidirect_gru_pallas.1} parent=1 // pred_check
      _
    $region43: #{bidirect_gru_pallas.1} parent=1 // pred_check_branch
      %41 = sbr.rel (0) target = $region45
    $region44: #{bidirect_gru_pallas.1} parent=1 // pred_region
      _
    $region45: #{bidirect_gru_pallas.1} parent=1 // pred_fallthru
      _
    // Predicated region
    $region46: #{bidirect_gru_pallas.1} parent=1 // pred_check
      _
    $region47: #{bidirect_gru_pallas.1} parent=1 // pred_check_branch
      %43 = sbr.rel (0) target = $region49
    $region48: #{bidirect_gru_pallas.1} parent=1 // pred_region
      _
    $region49: #{bidirect_gru_pallas.1} parent=1 // pred_fallthru
      _
    // Predicated region
    $region50: #{bidirect_gru_pallas.1} parent=1 // pred_check
      _
    $region51: #{bidirect_gru_pallas.1} parent=1 // pred_check_branch
      %45 = sbr.rel (0) target = $region53
    $region52: #{bidirect_gru_pallas.1} parent=1 // pred_region
      _
    $region53: #{bidirect_gru_pallas.1} parent=1 // pred_fallthru
      _
    // Predicated region
    $region54: #{bidirect_gru_pallas.1} parent=1 // pred_check
      _
    $region55: #{bidirect_gru_pallas.1} parent=1 // pred_check_branch
      %47 = sbr.rel (0) target = $region57
    $region56: #{bidirect_gru_pallas.1} parent=1 // pred_region
      _
    $region57: #{bidirect_gru_pallas.1} parent=1 // pred_fallthru
      _
    %v48 = vld [vmem:[%s0] sm:$0xff]
    %v49 = vld [vmem:[%s0 + $0x8] sm:$0xff]
    %v50 = vld [vmem:[%s1] sm:$0xff]
    %v51 = vld [vmem:[%s1 + $0x8] sm:$0xff]
    %v52 = vld [vmem:[%s1 + $0x10] sm:$0xff]
    %v53 = vld [vmem:[%s1 + $0x18] sm:$0xff]
    %v54 = vld [vmem:[%s4] sm:$0x1]
    %v56 = vperm.slane %v54, 0
    %vm58 = vcmask 261120
    %v60 = vsel %vm58, %v48, 0
    %v63 = vsel %vm58, %v49, 0
    %65 = vmatpush.msra.mxu0 0.0
    %66 = vmatpush.msra.mxu0 0.0
    %67 = vmatpush.msra.mxu0 0.0
    %68 = vmatpush.msra.mxu0 0.0
    %69 = vmatpush.msra.mxu0 0.0
    %70 = vmatpush.msra.mxu0 0.0
    %71 = vmatpush.msra.mxu0 0.0
    %72 = vmatpush.msra.mxu0 0.0
    %73 = vmatpush.msra.mxu0 0.0
    %74 = vmatpush.msra.mxu0 0.0
    %75 = vmatpush.msra.mxu0 0.0
    %76 = vmatpush.msra.mxu0 0.0
    %77 = vmatpush.msra.mxu0 %v53
    %78 = vmatpush.msra.mxu0 %v52
    %79 = vmatpush.msra.mxu0 %v51
    %80 = vmatpush.msra.mxu0 %v50
    %81 = vmatmul.f32.gmra.mxu0 %v60
    %v82 = vpop.f32.mrf.mxu0
    %v83 = vadd.f32 %v56, %v82
    %84 = vmatmul.f32.gmra.mxu0 %v63
    %v85 = vpop.f32.mrf.mxu0
    %v86 = vadd.f32 %v56, %v85
    %87 = vdwg.mxu0
    %v88 = vld [vmem:[%s2] sm:$0xff]
    %v89 = vld [vmem:[%s2 + $0x8] sm:$0xff]
    %v90 = vld [vmem:[%s2 + $0x10] sm:$0xff]
    %v91 = vld [vmem:[%s2 + $0x18] sm:$0xff]
    %v92 = vld [vmem:[%s5] sm:$0x1]
    %v94 = vperm.slane %v92, 0
    %96 = vmatpush.msra.mxu0 0.0
    %97 = vmatpush.msra.mxu0 0.0
    %98 = vmatpush.msra.mxu0 0.0
    %99 = vmatpush.msra.mxu0 0.0
    %100 = vmatpush.msra.mxu0 0.0
    %101 = vmatpush.msra.mxu0 0.0
    %102 = vmatpush.msra.mxu0 0.0
    %103 = vmatpush.msra.mxu0 0.0
    %104 = vmatpush.msra.mxu0 0.0
    %105 = vmatpush.msra.mxu0 0.0
    %106 = vmatpush.msra.mxu0 0.0
    %107 = vmatpush.msra.mxu0 0.0
    %108 = vmatpush.msra.mxu0 %v91
    %109 = vmatpush.msra.mxu0 %v90
    %110 = vmatpush.msra.mxu0 %v89
    %111 = vmatpush.msra.mxu0 %v88
    %112 = vmatmul.f32.gmra.mxu0 %v60
    %v113 = vpop.f32.mrf.mxu0
    %v114 = vadd.f32 %v94, %v113
    %115 = vmatmul.f32.gmra.mxu0 %v63
    %v116 = vpop.f32.mrf.mxu0
    %v117 = vadd.f32 %v94, %v116
    %118 = vdwg.mxu0
    %v119 = vld [vmem:[%s3] sm:$0xff]
    %v120 = vld [vmem:[%s3 + $0x8] sm:$0xff]
    %v121 = vld [vmem:[%s3 + $0x10] sm:$0xff]
    %v122 = vld [vmem:[%s3 + $0x18] sm:$0xff]
    %v123 = vld [vmem:[%s6] sm:$0x1]
    %v125 = vperm.slane %v123, 0
    %127 = vmatpush.msra.mxu0 0.0
    %128 = vmatpush.msra.mxu0 0.0
    %129 = vmatpush.msra.mxu0 0.0
    %130 = vmatpush.msra.mxu0 0.0
    %131 = vmatpush.msra.mxu0 0.0
    %132 = vmatpush.msra.mxu0 0.0
    %133 = vmatpush.msra.mxu0 0.0
    %134 = vmatpush.msra.mxu0 0.0
    %135 = vmatpush.msra.mxu0 0.0
    %136 = vmatpush.msra.mxu0 0.0
    %137 = vmatpush.msra.mxu0 0.0
    %138 = vmatpush.msra.mxu0 0.0
    %139 = vmatpush.msra.mxu0 %v122
    %140 = vmatpush.msra.mxu0 %v121
    %141 = vmatpush.msra.mxu0 %v120
    %142 = vmatpush.msra.mxu0 %v119
    %143 = vmatmul.f32.gmra.mxu0 %v60
    %v144 = vpop.f32.mrf.mxu0
    %v145 = vadd.f32 %v125, %v144
    %146 = vmatmul.f32.gmra.mxu0 %v63
    %v147 = vpop.f32.mrf.mxu0
    %v148 = vadd.f32 %v125, %v147
    %149 = vdwg.mxu0
    %v150 = vld [vmem:[%s7] sm:$0xff]
    %v151 = vld [vmem:[%s7 + $0x8] sm:$0xff]
    %v152 = vld [vmem:[%s7 + $0x10] sm:$0xff]
    %v153 = vld [vmem:[%s7 + $0x18] sm:$0xff]
    %v154 = vld [vmem:[%s7 + $0x20] sm:$0xff]
    %v155 = vld [vmem:[%s7 + $0x28] sm:$0xff]
    %v156 = vld [vmem:[%s7 + $0x30] sm:$0xff]
    %v157 = vld [vmem:[%s7 + $0x38] sm:$0xff]
    %v158 = vld [vmem:[%s8] sm:$0xff]
    %v159 = vld [vmem:[%s8 + $0x8] sm:$0xff]
    %v160 = vld [vmem:[%s8 + $0x10] sm:$0xff]
    %v161 = vld [vmem:[%s8 + $0x18] sm:$0xff]
    %v162 = vld [vmem:[%s8 + $0x20] sm:$0xff]
    %v163 = vld [vmem:[%s8 + $0x28] sm:$0xff]
    %v164 = vld [vmem:[%s8 + $0x30] sm:$0xff]
    %v165 = vld [vmem:[%s8 + $0x38] sm:$0xff]
    %v166 = vld [vmem:[%s9] sm:$0xff]
    %v167 = vld [vmem:[%s9 + $0x8] sm:$0xff]
    %v168 = vld [vmem:[%s9 + $0x10] sm:$0xff]
    %v169 = vld [vmem:[%s9 + $0x18] sm:$0xff]
    %v170 = vld [vmem:[%s9 + $0x20] sm:$0xff]
    %v171 = vld [vmem:[%s9 + $0x28] sm:$0xff]
    %v172 = vld [vmem:[%s9 + $0x30] sm:$0xff]
    %v173 = vld [vmem:[%s9 + $0x38] sm:$0xff]
    %v174 = vld [vmem:[%s10] sm:$0x1]
    %vm175 = vcmask 523264
    %v177 = vsel %vm175, 0.0, 0
    %179 = vmatpush.msra.mxu0 0.0
    %180 = vmatpush.msra.mxu0 0.0
    %181 = vmatpush.msra.mxu0 0.0
    %182 = vmatpush.msra.mxu0 0.0
    %183 = vmatpush.msra.mxu0 0.0
    %184 = vmatpush.msra.mxu0 0.0
    %185 = vmatpush.msra.mxu0 0.0
    %186 = vmatpush.msra.mxu0 0.0
    %187 = vmatpush.msra.mxu0 %v157
    %188 = vmatpush.msra.mxu0 %v156
    %189 = vmatpush.msra.mxu0 %v155
    %190 = vmatpush.msra.mxu0 %v154
    %191 = vmatpush.msra.mxu0 %v153
    %192 = vmatpush.msra.mxu0 %v152
    %193 = vmatpush.msra.mxu0 %v151
    %194 = vmatpush.msra.mxu0 %v150
    %195 = vmatmul.f32.gmra.mxu0 %v177
    %v196 = vpop.f32.mrf.mxu0
    %v197 = vadd.f32 0.0, %v196
    %198 = vdwg.mxu0
    %199 = vmatpush.msra.mxu0 0.0
    %200 = vmatpush.msra.mxu0 0.0
    %201 = vmatpush.msra.mxu0 0.0
    %202 = vmatpush.msra.mxu0 0.0
    %203 = vmatpush.msra.mxu0 0.0
    %204 = vmatpush.msra.mxu0 0.0
    %205 = vmatpush.msra.mxu0 0.0
    %206 = vmatpush.msra.mxu0 0.0
    %207 = vmatpush.msra.mxu0 %v165
    %208 = vmatpush.msra.mxu0 %v164
    %209 = vmatpush.msra.mxu0 %v163
    %210 = vmatpush.msra.mxu0 %v162
    %211 = vmatpush.msra.mxu0 %v161
    %212 = vmatpush.msra.mxu0 %v160
    %213 = vmatpush.msra.mxu0 %v159
    %214 = vmatpush.msra.mxu0 %v158
    %215 = vmatmul.f32.gmra.mxu0 %v177
    %v216 = vpop.f32.mrf.mxu0
    %v217 = vadd.f32 0.0, %v216
    %218 = vdwg.mxu0
    %v220 = vperm.slane %v174, 0
    %222 = vmatpush.msra.mxu0 0.0
    %223 = vmatpush.msra.mxu0 0.0
    %224 = vmatpush.msra.mxu0 0.0
    %225 = vmatpush.msra.mxu0 0.0
    %226 = vmatpush.msra.mxu0 0.0
    %227 = vmatpush.msra.mxu0 0.0
    %228 = vmatpush.msra.mxu0 0.0
    %229 = vmatpush.msra.mxu0 0.0
    %230 = vmatpush.msra.mxu0 %v173
    %231 = vmatpush.msra.mxu0 %v172
    %232 = vmatpush.msra.mxu0 %v171
    %233 = vmatpush.msra.mxu0 %v170
    %234 = vmatpush.msra.mxu0 %v169
    %235 = vmatpush.msra.mxu0 %v168
    %236 = vmatpush.msra.mxu0 %v167
    %237 = vmatpush.msra.mxu0 %v166
    %238 = vmatmul.f32.gmra.mxu0 %v177
    %v239 = vpop.f32.mrf.mxu0
    %v240 = vadd.f32 %v220, %v239
    %241 = vdwg.mxu0
    %v242 = vadd.f32 %v83, %v197
    %v243 = vxor.u32 %v242, 2147483648
    %v244 = vmul.f32 %v243, 1.442695
    %v245 = vpow.pop %v244
    %v246 = vadd.f32 %v245, 1.0
    %v247 = vrcp.pop %v246
    %v248 = vmul.f32 %v246, %v247
    %v249 = vsub.f32 1.0, %v248
    %v250 = vmul.f32 %v247, %v249
    %v251 = vadd.f32 %v247, %v250
    %vm252 = vweird.f32 %v246
    %vm253 = vweird.f32 %v247
    %vm254 = vmor %vm252, %vm253
    %v255 = vsel %vm254, %v247, %v251
    %v256 = vand.u32 2147483647, %v246
    %vm257 = vcmp.eq.f32.partialorder %v256, 8.507059e+37
    %v258 = vand.u32 %v246, 2147483648
    %v259 = vor.u32 1.1754944e-38, %v258
    %v260 = vsel %vm257, %v259, %v255
    %v261 = vmul.f32 1.0, %v260
    %v262 = vadd.f32 %v114, %v217
    %v263 = vxor.u32 %v262, 2147483648
    %v264 = vmul.f32 %v263, 1.442695
    %v265 = vpow.pop %v264
    %v266 = vadd.f32 %v265, 1.0
    %v267 = vrcp.pop %v266
    %v268 = vmul.f32 %v266, %v267
    %v269 = vsub.f32 1.0, %v268
    %v270 = vmul.f32 %v267, %v269
    %v271 = vadd.f32 %v267, %v270
    %vm272 = vweird.f32 %v266
    %vm273 = vweird.f32 %v267
    %vm274 = vmor %vm272, %vm273
    %v275 = vsel %vm274, %v267, %v271
    %v276 = vand.u32 2147483647, %v266
    %vm277 = vcmp.eq.f32.partialorder %v276, 8.507059e+37
    %v278 = vand.u32 %v266, 2147483648
    %v279 = vor.u32 1.1754944e-38, %v278
    %v280 = vsel %vm277, %v279, %v275
    %v281 = vmul.f32 1.0, %v280
    %v282 = vmul.f32 %v261, %v240
    %v283 = vadd.f32 %v145, %v282
    %v284 = vtanh.pop %v283
    %v285 = vsub.f32 1.0, %v281
    %v286 = vmul.f32 %v285, %v284
    %v287 = vmul.f32 %v281, 0.0
    %v288 = vadd.f32 %v286, %v287
    %vm289 = vcmask 254976
    %290 = vst.msk [vmem:[#allocation2] sm:$0x3] %vm289, %v288
    %292 = vrot.lane.b32.xlu0 %v288, 96
    %v293 = vpop.permute.xlu0 %292
    %295 = vst.msk [vmem:[#allocation3 + $0xe] sm:$0x3] %vm289, %v293
    %v296 = vsel %vm175, %v288, 0
    %298 = vmatpush.msra.mxu0 0.0
    %299 = vmatpush.msra.mxu0 0.0
    %300 = vmatpush.msra.mxu0 0.0
    %301 = vmatpush.msra.mxu0 0.0
    %302 = vmatpush.msra.mxu0 0.0
    %303 = vmatpush.msra.mxu0 0.0
    %304 = vmatpush.msra.mxu0 0.0
    %305 = vmatpush.msra.mxu0 0.0
    %306 = vmatpush.msra.mxu0 %v157
    %307 = vmatpush.msra.mxu0 %v156
    %308 = vmatpush.msra.mxu0 %v155
    %309 = vmatpush.msra.mxu0 %v154
    %310 = vmatpush.msra.mxu0 %v153
    %311 = vmatpush.msra.mxu0 %v152
    %312 = vmatpush.msra.mxu0 %v151
    %313 = vmatpush.msra.mxu0 %v150
    %314 = vmatmul.f32.gmra.mxu0 %v296
    %v315 = vpop.f32.mrf.mxu0
    %v316 = vadd.f32 0.0, %v315
    %317 = vdwg.mxu0
    %318 = vmatpush.msra.mxu0 0.0
    %319 = vmatpush.msra.mxu0 0.0
    %320 = vmatpush.msra.mxu0 0.0
    %321 = vmatpush.msra.mxu0 0.0
    %322 = vmatpush.msra.mxu0 0.0
    %323 = vmatpush.msra.mxu0 0.0
    %324 = vmatpush.msra.mxu0 0.0
    %325 = vmatpush.msra.mxu0 0.0
    %326 = vmatpush.msra.mxu0 %v165
    %327 = vmatpush.msra.mxu0 %v164
    %328 = vmatpush.msra.mxu0 %v163
    %329 = vmatpush.msra.mxu0 %v162
    %330 = vmatpush.msra.mxu0 %v161
    %331 = vmatpush.msra.mxu0 %v160
    %332 = vmatpush.msra.mxu0 %v159
    %333 = vmatpush.msra.mxu0 %v158
    %334 = vmatmul.f32.gmra.mxu0 %v296
    %v335 = vpop.f32.mrf.mxu0
    %v336 = vadd.f32 0.0, %v335
    %337 = vdwg.mxu0
    %338 = vmatpush.msra.mxu0 0.0
    %339 = vmatpush.msra.mxu0 0.0
    %340 = vmatpush.msra.mxu0 0.0
    %341 = vmatpush.msra.mxu0 0.0
    %342 = vmatpush.msra.mxu0 0.0
    %343 = vmatpush.msra.mxu0 0.0
    %344 = vmatpush.msra.mxu0 0.0
    %345 = vmatpush.msra.mxu0 0.0
    %346 = vmatpush.msra.mxu0 %v173
    %347 = vmatpush.msra.mxu0 %v172
    %348 = vmatpush.msra.mxu0 %v171
    %349 = vmatpush.msra.mxu0 %v170
    %350 = vmatpush.msra.mxu0 %v169
    %351 = vmatpush.msra.mxu0 %v168
    %352 = vmatpush.msra.mxu0 %v167
    %353 = vmatpush.msra.mxu0 %v166
    %354 = vmatmul.f32.gmra.mxu0 %v296
    %v355 = vpop.f32.mrf.mxu0
    %v356 = vadd.f32 %v220, %v355
    %357 = vdwg.mxu0
    %v359 = vrot.slane %v316, 6
    %v361 = vadd.f32 %v83, %v359
    %v362 = vxor.u32 %v361, 2147483648
    %v363 = vmul.f32 %v362, 1.442695
    %v364 = vpow.pop %v363
    %v365 = vadd.f32 %v364, 1.0
    %v366 = vrcp.pop %v365
    %v367 = vmul.f32 %v365, %v366
    %v368 = vsub.f32 1.0, %v367
    %v369 = vmul.f32 %v366, %v368
    %v370 = vadd.f32 %v366, %v369
    %vm371 = vweird.f32 %v365
    %vm372 = vweird.f32 %v366
    %vm373 = vmor %vm371, %vm372
    %v374 = vsel %vm373, %v366, %v370
    %v375 = vand.u32 2147483647, %v365
    %vm376 = vcmp.eq.f32.partialorder %v375, 8.507059e+37
    %v377 = vand.u32 %v365, 2147483648
    %v378 = vor.u32 1.1754944e-38, %v377
    %v379 = vsel %vm376, %v378, %v374
    %v380 = vmul.f32 1.0, %v379
    %v382 = vrot.slane %v336, 6
    %v384 = vadd.f32 %v114, %v382
    %v385 = vxor.u32 %v384, 2147483648
    %v386 = vmul.f32 %v385, 1.442695
    %v387 = vpow.pop %v386
    %v388 = vadd.f32 %v387, 1.0
    %v389 = vrcp.pop %v388
    %v390 = vmul.f32 %v388, %v389
    %v391 = vsub.f32 1.0, %v390
    %v392 = vmul.f32 %v389, %v391
    %v393 = vadd.f32 %v389, %v392
    %vm394 = vweird.f32 %v388
    %vm395 = vweird.f32 %v389
    %vm396 = vmor %vm394, %vm395
    %v397 = vsel %vm396, %v389, %v393
    %v398 = vand.u32 2147483647, %v388
    %vm399 = vcmp.eq.f32.partialorder %v398, 8.507059e+37
    %v400 = vand.u32 %v388, 2147483648
    %v401 = vor.u32 1.1754944e-38, %v400
    %v402 = vsel %vm399, %v401, %v397
    %v403 = vmul.f32 1.0, %v402
    %v405 = vrot.slane %v356, 6
    %v407 = vmul.f32 %v380, %v405
    %v408 = vadd.f32 %v145, %v407
    %v409 = vtanh.pop %v408
    %v410 = vsub.f32 1.0, %v403
    %v411 = vmul.f32 %v410, %v409
    %v412 = vrot.slane %v288, 6
    %v414 = vmul.f32 %v403, %v412
    %v415 = vadd.f32 %v411, %v414
    %vm416 = vcmask 257026
    %417 = vst.msk [vmem:[#allocation2] sm:$0xc] %vm416, %v415
    %419 = vrot.lane.b32.xlu0 %v415, 96
    %v420 = vpop.permute.xlu0 %419
    %422 = vst.msk [vmem:[#allocation3 + $0xa] sm:$0xc] %vm416, %v420
    %v423 = vrot.slane %v415, 2
    %v424 = vsel %vm175, %v423, 0
    %426 = vmatpush.msra.mxu0 0.0
    %427 = vmatpush.msra.mxu0 0.0
    %428 = vmatpush.msra.mxu0 0.0
    %429 = vmatpush.msra.mxu0 0.0
    %430 = vmatpush.msra.mxu0 0.0
    %431 = vmatpush.msra.mxu0 0.0
    %432 = vmatpush.msra.mxu0 0.0
    %433 = vmatpush.msra.mxu0 0.0
    %434 = vmatpush.msra.mxu0 %v157
    %435 = vmatpush.msra.mxu0 %v156
    %436 = vmatpush.msra.mxu0 %v155
    %437 = vmatpush.msra.mxu0 %v154
    %438 = vmatpush.msra.mxu0 %v153
    %439 = vmatpush.msra.mxu0 %v152
    %440 = vmatpush.msra.mxu0 %v151
    %441 = vmatpush.msra.mxu0 %v150
    %442 = vmatmul.f32.gmra.mxu0 %v424
    %v443 = vpop.f32.mrf.mxu0
    %v444 = vadd.f32 0.0, %v443
    %445 = vdwg.mxu0
    %446 = vmatpush.msra.mxu0 0.0
    %447 = vmatpush.msra.mxu0 0.0
    %448 = vmatpush.msra.mxu0 0.0
    %449 = vmatpush.msra.mxu0 0.0
    %450 = vmatpush.msra.mxu0 0.0
    %451 = vmatpush.msra.mxu0 0.0
    %452 = vmatpush.msra.mxu0 0.0
    %453 = vmatpush.msra.mxu0 0.0
    %454 = vmatpush.msra.mxu0 %v165
    %455 = vmatpush.msra.mxu0 %v164
    %456 = vmatpush.msra.mxu0 %v163
    %457 = vmatpush.msra.mxu0 %v162
    %458 = vmatpush.msra.mxu0 %v161
    %459 = vmatpush.msra.mxu0 %v160
    %460 = vmatpush.msra.mxu0 %v159
    %461 = vmatpush.msra.mxu0 %v158
    %462 = vmatmul.f32.gmra.mxu0 %v424
    %v463 = vpop.f32.mrf.mxu0
    %v464 = vadd.f32 0.0, %v463
    %465 = vdwg.mxu0
    %466 = vmatpush.msra.mxu0 0.0
    %467 = vmatpush.msra.mxu0 0.0
    %468 = vmatpush.msra.mxu0 0.0
    %469 = vmatpush.msra.mxu0 0.0
    %470 = vmatpush.msra.mxu0 0.0
    %471 = vmatpush.msra.mxu0 0.0
    %472 = vmatpush.msra.mxu0 0.0
    %473 = vmatpush.msra.mxu0 0.0
    %474 = vmatpush.msra.mxu0 %v173
    %475 = vmatpush.msra.mxu0 %v172
    %476 = vmatpush.msra.mxu0 %v171
    %477 = vmatpush.msra.mxu0 %v170
    %478 = vmatpush.msra.mxu0 %v169
    %479 = vmatpush.msra.mxu0 %v168
    %480 = vmatpush.msra.mxu0 %v167
    %481 = vmatpush.msra.mxu0 %v166
    %482 = vmatmul.f32.gmra.mxu0 %v424
    %v483 = vpop.f32.mrf.mxu0
    %v484 = vadd.f32 %v220, %v483
    %485 = vdwg.mxu0
    %v487 = vrot.slane %v444, 4
    %v489 = vadd.f32 %v83, %v487
    %v490 = vxor.u32 %v489, 2147483648
    %v491 = vmul.f32 %v490, 1.442695
    %v492 = vpow.pop %v491
    %v493 = vadd.f32 %v492, 1.0
    %v494 = vrcp.pop %v493
    %v495 = vmul.f32 %v493, %v494
    %v496 = vsub.f32 1.0, %v495
    %v497 = vmul.f32 %v494, %v496
    %v498 = vadd.f32 %v494, %v497
    %vm499 = vweird.f32 %v493
    %vm500 = vweird.f32 %v494
    %vm501 = vmor %vm499, %vm500
    %v502 = vsel %vm501, %v494, %v498
    %v503 = vand.u32 2147483647, %v493
    %vm504 = vcmp.eq.f32.partialorder %v503, 8.507059e+37
    %v505 = vand.u32 %v493, 2147483648
    %v506 = vor.u32 1.1754944e-38, %v505
    %v507 = vsel %vm504, %v506, %v502
    %v508 = vmul.f32 1.0, %v507
    %v510 = vrot.slane %v464, 4
    %v512 = vadd.f32 %v114, %v510
    %v513 = vxor.u32 %v512, 2147483648
    %v514 = vmul.f32 %v513, 1.442695
    %v515 = vpow.pop %v514
    %v516 = vadd.f32 %v515, 1.0
    %v517 = vrcp.pop %v516
    %v518 = vmul.f32 %v516, %v517
    %v519 = vsub.f32 1.0, %v518
    %v520 = vmul.f32 %v517, %v519
    %v521 = vadd.f32 %v517, %v520
    %vm522 = vweird.f32 %v516
    %vm523 = vweird.f32 %v517
    %vm524 = vmor %vm522, %vm523
    %v525 = vsel %vm524, %v517, %v521
    %v526 = vand.u32 2147483647, %v516
    %vm527 = vcmp.eq.f32.partialorder %v526, 8.507059e+37
    %v528 = vand.u32 %v516, 2147483648
    %v529 = vor.u32 1.1754944e-38, %v528
    %v530 = vsel %vm527, %v529, %v525
    %v531 = vmul.f32 1.0, %v530
    %v533 = vrot.slane %v484, 4
    %v535 = vmul.f32 %v508, %v533
    %v536 = vadd.f32 %v145, %v535
    %v537 = vtanh.pop %v536
    %v538 = vsub.f32 1.0, %v531
    %v539 = vmul.f32 %v538, %v537
    %v540 = vrot.slane %v415, 6
    %v542 = vmul.f32 %v531, %v540
    %v543 = vadd.f32 %v539, %v542
    %vm544 = vcmask 259076
    %545 = vst.msk [vmem:[#allocation2] sm:$0x30] %vm544, %v543
    %547 = vrot.lane.b32.xlu0 %v543, 96
    %v548 = vpop.permute.xlu0 %547
    %550 = vst.msk [vmem:[#allocation3 + $0x6] sm:$0x30] %vm544, %v548
    %v551 = vrot.slane %v543, 4
    %v552 = vsel %vm175, %v551, 0
    %554 = vmatpush.msra.mxu0 0.0
    %555 = vmatpush.msra.mxu0 0.0
    %556 = vmatpush.msra.mxu0 0.0
    %557 = vmatpush.msra.mxu0 0.0
    %558 = vmatpush.msra.mxu0 0.0
    %559 = vmatpush.msra.mxu0 0.0
    %560 = vmatpush.msra.mxu0 0.0
    %561 = vmatpush.msra.mxu0 0.0
    %562 = vmatpush.msra.mxu0 %v157
    %563 = vmatpush.msra.mxu0 %v156
    %564 = vmatpush.msra.mxu0 %v155
    %565 = vmatpush.msra.mxu0 %v154
    %566 = vmatpush.msra.mxu0 %v153
    %567 = vmatpush.msra.mxu0 %v152
    %568 = vmatpush.msra.mxu0 %v151
    %569 = vmatpush.msra.mxu0 %v150
    %570 = vmatmul.f32.gmra.mxu0 %v552
    %v571 = vpop.f32.mrf.mxu0
    %v572 = vadd.f32 0.0, %v571
    %573 = vdwg.mxu0
    %574 = vmatpush.msra.mxu0 0.0
    %575 = vmatpush.msra.mxu0 0.0
    %576 = vmatpush.msra.mxu0 0.0
    %577 = vmatpush.msra.mxu0 0.0
    %578 = vmatpush.msra.mxu0 0.0
    %579 = vmatpush.msra.mxu0 0.0
    %580 = vmatpush.msra.mxu0 0.0
    %581 = vmatpush.msra.mxu0 0.0
    %582 = vmatpush.msra.mxu0 %v165
    %583 = vmatpush.msra.mxu0 %v164
    %584 = vmatpush.msra.mxu0 %v163
    %585 = vmatpush.msra.mxu0 %v162
    %586 = vmatpush.msra.mxu0 %v161
    %587 = vmatpush.msra.mxu0 %v160
    %588 = vmatpush.msra.mxu0 %v159
    %589 = vmatpush.msra.mxu0 %v158
    %590 = vmatmul.f32.gmra.mxu0 %v552
    %v591 = vpop.f32.mrf.mxu0
    %v592 = vadd.f32 0.0, %v591
    %593 = vdwg.mxu0
    %594 = vmatpush.msra.mxu0 0.0
    %595 = vmatpush.msra.mxu0 0.0
    %596 = vmatpush.msra.mxu0 0.0
    %597 = vmatpush.msra.mxu0 0.0
    %598 = vmatpush.msra.mxu0 0.0
    %599 = vmatpush.msra.mxu0 0.0
    %600 = vmatpush.msra.mxu0 0.0
    %601 = vmatpush.msra.mxu0 0.0
    %602 = vmatpush.msra.mxu0 %v173
    %603 = vmatpush.msra.mxu0 %v172
    %604 = vmatpush.msra.mxu0 %v171
    %605 = vmatpush.msra.mxu0 %v170
    %606 = vmatpush.msra.mxu0 %v169
    %607 = vmatpush.msra.mxu0 %v168
    %608 = vmatpush.msra.mxu0 %v167
    %609 = vmatpush.msra.mxu0 %v166
    %610 = vmatmul.f32.gmra.mxu0 %v552
    %v611 = vpop.f32.mrf.mxu0
    %v612 = vadd.f32 %v220, %v611
    %613 = vdwg.mxu0
    %v615 = vrot.slane %v572, 2
    %v617 = vadd.f32 %v83, %v615
    %v618 = vxor.u32 %v617, 2147483648
    %v619 = vmul.f32 %v618, 1.442695
    %v620 = vpow.pop %v619
    %v621 = vadd.f32 %v620, 1.0
    %v622 = vrcp.pop %v621
    %v623 = vmul.f32 %v621, %v622
    %v624 = vsub.f32 1.0, %v623
    %v625 = vmul.f32 %v622, %v624
    %v626 = vadd.f32 %v622, %v625
    %vm627 = vweird.f32 %v621
    %vm628 = vweird.f32 %v622
    %vm629 = vmor %vm627, %vm628
    %v630 = vsel %vm629, %v622, %v626
    %v631 = vand.u32 2147483647, %v621
    %vm632 = vcmp.eq.f32.partialorder %v631, 8.507059e+37
    %v633 = vand.u32 %v621, 2147483648
    %v634 = vor.u32 1.1754944e-38, %v633
    %v635 = vsel %vm632, %v634, %v630
    %v636 = vmul.f32 1.0, %v635
    %v638 = vrot.slane %v592, 2
    %v640 = vadd.f32 %v114, %v638
    %v641 = vxor.u32 %v640, 2147483648
    %v642 = vmul.f32 %v641, 1.442695
    %v643 = vpow.pop %v642
    %v644 = vadd.f32 %v643, 1.0
    %v645 = vrcp.pop %v644
    %v646 = vmul.f32 %v644, %v645
    %v647 = vsub.f32 1.0, %v646
    %v648 = vmul.f32 %v645, %v647
    %v649 = vadd.f32 %v645, %v648
    %vm650 = vweird.f32 %v644
    %vm651 = vweird.f32 %v645
    %vm652 = vmor %vm650, %vm651
    %v653 = vsel %vm652, %v645, %v649
    %v654 = vand.u32 2147483647, %v644
    %vm655 = vcmp.eq.f32.partialorder %v654, 8.507059e+37
    %v656 = vand.u32 %v644, 2147483648
    %v657 = vor.u32 1.1754944e-38, %v656
    %v658 = vsel %vm655, %v657, %v653
    %v659 = vmul.f32 1.0, %v658
    %v661 = vrot.slane %v612, 2
    %v663 = vmul.f32 %v636, %v661
    %v664 = vadd.f32 %v145, %v663
    %v665 = vtanh.pop %v664
    %v666 = vsub.f32 1.0, %v659
    %v667 = vmul.f32 %v666, %v665
    %v668 = vrot.slane %v543, 6
    %v670 = vmul.f32 %v659, %v668
    %v671 = vadd.f32 %v667, %v670
    %vm672 = vcmask 261126
    %673 = vst.msk [vmem:[#allocation2] sm:$0xc0] %vm672, %v671
    %675 = vrot.lane.b32.xlu0 %v671, 96
    %v676 = vpop.permute.xlu0 %675
    %678 = vst.msk [vmem:[#allocation3 + $0x2] sm:$0xc0] %vm672, %v676
    %v679 = vrot.slane %v671, 6
    %v680 = vsel %vm175, %v679, 0
    %682 = vmatpush.msra.mxu0 0.0
    %683 = vmatpush.msra.mxu0 0.0
    %684 = vmatpush.msra.mxu0 0.0
    %685 = vmatpush.msra.mxu0 0.0
    %686 = vmatpush.msra.mxu0 0.0
    %687 = vmatpush.msra.mxu0 0.0
    %688 = vmatpush.msra.mxu0 0.0
    %689 = vmatpush.msra.mxu0 0.0
    %690 = vmatpush.msra.mxu0 %v157
    %691 = vmatpush.msra.mxu0 %v156
    %692 = vmatpush.msra.mxu0 %v155
    %693 = vmatpush.msra.mxu0 %v154
    %694 = vmatpush.msra.mxu0 %v153
    %695 = vmatpush.msra.mxu0 %v152
    %696 = vmatpush.msra.mxu0 %v151
    %697 = vmatpush.msra.mxu0 %v150
    %698 = vmatmul.f32.gmra.mxu0 %v680
    %v699 = vpop.f32.mrf.mxu0
    %v700 = vadd.f32 0.0, %v699
    %701 = vdwg.mxu0
    %702 = vmatpush.msra.mxu0 0.0
    %703 = vmatpush.msra.mxu0 0.0
    %704 = vmatpush.msra.mxu0 0.0
    %705 = vmatpush.msra.mxu0 0.0
    %706 = vmatpush.msra.mxu0 0.0
    %707 = vmatpush.msra.mxu0 0.0
    %708 = vmatpush.msra.mxu0 0.0
    %709 = vmatpush.msra.mxu0 0.0
    %710 = vmatpush.msra.mxu0 %v165
    %711 = vmatpush.msra.mxu0 %v164
    %712 = vmatpush.msra.mxu0 %v163
    %713 = vmatpush.msra.mxu0 %v162
    %714 = vmatpush.msra.mxu0 %v161
    %715 = vmatpush.msra.mxu0 %v160
    %716 = vmatpush.msra.mxu0 %v159
    %717 = vmatpush.msra.mxu0 %v158
    %718 = vmatmul.f32.gmra.mxu0 %v680
    %v719 = vpop.f32.mrf.mxu0
    %v720 = vadd.f32 0.0, %v719
    %721 = vdwg.mxu0
    %722 = vmatpush.msra.mxu0 0.0
    %723 = vmatpush.msra.mxu0 0.0
    %724 = vmatpush.msra.mxu0 0.0
    %725 = vmatpush.msra.mxu0 0.0
    %726 = vmatpush.msra.mxu0 0.0
    %727 = vmatpush.msra.mxu0 0.0
    %728 = vmatpush.msra.mxu0 0.0
    %729 = vmatpush.msra.mxu0 0.0
    %730 = vmatpush.msra.mxu0 %v173
    %731 = vmatpush.msra.mxu0 %v172
    %732 = vmatpush.msra.mxu0 %v171
    %733 = vmatpush.msra.mxu0 %v170
    %734 = vmatpush.msra.mxu0 %v169
    %735 = vmatpush.msra.mxu0 %v168
    %736 = vmatpush.msra.mxu0 %v167
    %737 = vmatpush.msra.mxu0 %v166
    %738 = vmatmul.f32.gmra.mxu0 %v680
    %v739 = vpop.f32.mrf.mxu0
    %v740 = vadd.f32 %v220, %v739
    %741 = vdwg.mxu0
    %v742 = vadd.f32 %v86, %v700
    %v743 = vxor.u32 %v742, 2147483648
    %v744 = vmul.f32 %v743, 1.442695
    %v745 = vpow.pop %v744
    %v746 = vadd.f32 %v745, 1.0
    %v747 = vrcp.pop %v746
    %v748 = vmul.f32 %v746, %v747
    %v749 = vsub.f32 1.0, %v748
    %v750 = vmul.f32 %v747, %v749
    %v751 = vadd.f32 %v747, %v750
    %vm752 = vweird.f32 %v746
    %vm753 = vweird.f32 %v747
    %vm754 = vmor %vm752, %vm753
    %v755 = vsel %vm754, %v747, %v751
    %v756 = vand.u32 2147483647, %v746
    %vm757 = vcmp.eq.f32.partialorder %v756, 8.507059e+37
    %v758 = vand.u32 %v746, 2147483648
    %v759 = vor.u32 1.1754944e-38, %v758
    %v760 = vsel %vm757, %v759, %v755
    %v761 = vmul.f32 1.0, %v760
    %v762 = vadd.f32 %v117, %v720
    %v763 = vxor.u32 %v762, 2147483648
    %v764 = vmul.f32 %v763, 1.442695
    %v765 = vpow.pop %v764
    %v766 = vadd.f32 %v765, 1.0
    %v767 = vrcp.pop %v766
    %v768 = vmul.f32 %v766, %v767
    %v769 = vsub.f32 1.0, %v768
    %v770 = vmul.f32 %v767, %v769
    %v771 = vadd.f32 %v767, %v770
    %vm772 = vweird.f32 %v766
    %vm773 = vweird.f32 %v767
    %vm774 = vmor %vm772, %vm773
    %v775 = vsel %vm774, %v767, %v771
    %v776 = vand.u32 2147483647, %v766
    %vm777 = vcmp.eq.f32.partialorder %v776, 8.507059e+37
    %v778 = vand.u32 %v766, 2147483648
    %v779 = vor.u32 1.1754944e-38, %v778
    %v780 = vsel %vm777, %v779, %v775
    %v781 = vmul.f32 1.0, %v780
    %v782 = vmul.f32 %v761, %v740
    %v783 = vadd.f32 %v148, %v782
    %v784 = vtanh.pop %v783
    %v785 = vsub.f32 1.0, %v781
    %v786 = vmul.f32 %v785, %v784
    %v788 = vmul.f32 %v781, %v679
    %v789 = vadd.f32 %v786, %v788
    %790 = vst.msk [vmem:[#allocation2 + $0x8] sm:$0x3] %vm289, %v789
    %792 = vrot.lane.b32.xlu0 %v789, 96
    %v793 = vpop.permute.xlu0 %792
    %795 = vst.msk [vmem:[#allocation3 + $0x6] sm:$0x3] %vm289, %v793
    %v796 = vsel %vm175, %v789, 0
    %798 = vmatpush.msra.mxu0 0.0
    %799 = vmatpush.msra.mxu0 0.0
    %800 = vmatpush.msra.mxu0 0.0
    %801 = vmatpush.msra.mxu0 0.0
    %802 = vmatpush.msra.mxu0 0.0
    %803 = vmatpush.msra.mxu0 0.0
    %804 = vmatpush.msra.mxu0 0.0
    %805 = vmatpush.msra.mxu0 0.0
    %806 = vmatpush.msra.mxu0 %v157
    %807 = vmatpush.msra.mxu0 %v156
    %808 = vmatpush.msra.mxu0 %v155
    %809 = vmatpush.msra.mxu0 %v154
    %810 = vmatpush.msra.mxu0 %v153
    %811 = vmatpush.msra.mxu0 %v152
    %812 = vmatpush.msra.mxu0 %v151
    %813 = vmatpush.msra.mxu0 %v150
    %814 = vmatmul.f32.gmra.mxu0 %v796
    %v815 = vpop.f32.mrf.mxu0
    %v816 = vadd.f32 0.0, %v815
    %817 = vdwg.mxu0
    %818 = vmatpush.msra.mxu0 0.0
    %819 = vmatpush.msra.mxu0 0.0
    %820 = vmatpush.msra.mxu0 0.0
    %821 = vmatpush.msra.mxu0 0.0
    %822 = vmatpush.msra.mxu0 0.0
    %823 = vmatpush.msra.mxu0 0.0
    %824 = vmatpush.msra.mxu0 0.0
    %825 = vmatpush.msra.mxu0 0.0
    %826 = vmatpush.msra.mxu0 %v165
    %827 = vmatpush.msra.mxu0 %v164
    %828 = vmatpush.msra.mxu0 %v163
    %829 = vmatpush.msra.mxu0 %v162
    %830 = vmatpush.msra.mxu0 %v161
    %831 = vmatpush.msra.mxu0 %v160
    %832 = vmatpush.msra.mxu0 %v159
    %833 = vmatpush.msra.mxu0 %v158
    %834 = vmatmul.f32.gmra.mxu0 %v796
    %v835 = vpop.f32.mrf.mxu0
    %v836 = vadd.f32 0.0, %v835
    %837 = vdwg.mxu0
    %838 = vmatpush.msra.mxu0 0.0
    %839 = vmatpush.msra.mxu0 0.0
    %840 = vmatpush.msra.mxu0 0.0
    %841 = vmatpush.msra.mxu0 0.0
    %842 = vmatpush.msra.mxu0 0.0
    %843 = vmatpush.msra.mxu0 0.0
    %844 = vmatpush.msra.mxu0 0.0
    %845 = vmatpush.msra.mxu0 0.0
    %846 = vmatpush.msra.mxu0 %v173
    %847 = vmatpush.msra.mxu0 %v172
    %848 = vmatpush.msra.mxu0 %v171
    %849 = vmatpush.msra.mxu0 %v170
    %850 = vmatpush.msra.mxu0 %v169
    %851 = vmatpush.msra.mxu0 %v168
    %852 = vmatpush.msra.mxu0 %v167
    %853 = vmatpush.msra.mxu0 %v166
    %854 = vmatmul.f32.gmra.mxu0 %v796
    %v855 = vpop.f32.mrf.mxu0
    %v856 = vadd.f32 %v220, %v855
    %857 = vdwg.mxu0
    %v859 = vrot.slane %v816, 6
    %v861 = vadd.f32 %v86, %v859
    %v862 = vxor.u32 %v861, 2147483648
    %v863 = vmul.f32 %v862, 1.442695
    %v864 = vpow.pop %v863
    %v865 = vadd.f32 %v864, 1.0
    %v866 = vrcp.pop %v865
    %v867 = vmul.f32 %v865, %v866
    %v868 = vsub.f32 1.0, %v867
    %v869 = vmul.f32 %v866, %v868
    %v870 = vadd.f32 %v866, %v869
    %vm871 = vweird.f32 %v865
    %vm872 = vweird.f32 %v866
    %vm873 = vmor %vm871, %vm872
    %v874 = vsel %vm873, %v866, %v870
    %v875 = vand.u32 2147483647, %v865
    %vm876 = vcmp.eq.f32.partialorder %v875, 8.507059e+37
    %v877 = vand.u32 %v865, 2147483648
    %v878 = vor.u32 1.1754944e-38, %v877
    %v879 = vsel %vm876, %v878, %v874
    %v880 = vmul.f32 1.0, %v879
    %v882 = vrot.slane %v836, 6
    %v884 = vadd.f32 %v117, %v882
    %v885 = vxor.u32 %v884, 2147483648
    %v886 = vmul.f32 %v885, 1.442695
    %v887 = vpow.pop %v886
    %v888 = vadd.f32 %v887, 1.0
    %v889 = vrcp.pop %v888
    %v890 = vmul.f32 %v888, %v889
    %v891 = vsub.f32 1.0, %v890
    %v892 = vmul.f32 %v889, %v891
    %v893 = vadd.f32 %v889, %v892
    %vm894 = vweird.f32 %v888
    %vm895 = vweird.f32 %v889
    %vm896 = vmor %vm894, %vm895
    %v897 = vsel %vm896, %v889, %v893
    %v898 = vand.u32 2147483647, %v888
    %vm899 = vcmp.eq.f32.partialorder %v898, 8.507059e+37
    %v900 = vand.u32 %v888, 2147483648
    %v901 = vor.u32 1.1754944e-38, %v900
    %v902 = vsel %vm899, %v901, %v897
    %v903 = vmul.f32 1.0, %v902
    %v905 = vrot.slane %v856, 6
    %v907 = vmul.f32 %v880, %v905
    %v908 = vadd.f32 %v148, %v907
    %v909 = vtanh.pop %v908
    %v910 = vsub.f32 1.0, %v903
    %v911 = vmul.f32 %v910, %v909
    %v912 = vrot.slane %v789, 6
    %v914 = vmul.f32 %v903, %v912
    %v915 = vadd.f32 %v911, %v914
    %916 = vst.msk [vmem:[#allocation2 + $0x8] sm:$0xc] %vm416, %v915
    %918 = vrot.lane.b32.xlu0 %v915, 96
    %v919 = vpop.permute.xlu0 %918
    %921 = vst.msk [vmem:[#allocation3 + $0x2] sm:$0xc] %vm416, %v919
    %v922 = vrot.slane %v915, 2
    %v923 = vsel %vm175, %v922, 0
    %925 = vmatpush.msra.mxu0 0.0
    %926 = vmatpush.msra.mxu0 0.0
    %927 = vmatpush.msra.mxu0 0.0
    %928 = vmatpush.msra.mxu0 0.0
    %929 = vmatpush.msra.mxu0 0.0
    %930 = vmatpush.msra.mxu0 0.0
    %931 = vmatpush.msra.mxu0 0.0
    %932 = vmatpush.msra.mxu0 0.0
    %933 = vmatpush.msra.mxu0 %v157
    %934 = vmatpush.msra.mxu0 %v156
    %935 = vmatpush.msra.mxu0 %v155
    %936 = vmatpush.msra.mxu0 %v154
    %937 = vmatpush.msra.mxu0 %v153
    %938 = vmatpush.msra.mxu0 %v152
    %939 = vmatpush.msra.mxu0 %v151
    %940 = vmatpush.msra.mxu0 %v150
    %941 = vmatmul.f32.gmra.mxu0 %v923
    %v942 = vpop.f32.mrf.mxu0
    %v943 = vadd.f32 0.0, %v942
    %944 = vdwg.mxu0
    %945 = vmatpush.msra.mxu0 0.0
    %946 = vmatpush.msra.mxu0 0.0
    %947 = vmatpush.msra.mxu0 0.0
    %948 = vmatpush.msra.mxu0 0.0
    %949 = vmatpush.msra.mxu0 0.0
    %950 = vmatpush.msra.mxu0 0.0
    %951 = vmatpush.msra.mxu0 0.0
    %952 = vmatpush.msra.mxu0 0.0
    %953 = vmatpush.msra.mxu0 %v165
    %954 = vmatpush.msra.mxu0 %v164
    %955 = vmatpush.msra.mxu0 %v163
    %956 = vmatpush.msra.mxu0 %v162
    %957 = vmatpush.msra.mxu0 %v161
    %958 = vmatpush.msra.mxu0 %v160
    %959 = vmatpush.msra.mxu0 %v159
    %960 = vmatpush.msra.mxu0 %v158
    %961 = vmatmul.f32.gmra.mxu0 %v923
    %v962 = vpop.f32.mrf.mxu0
    %v963 = vadd.f32 0.0, %v962
    %964 = vdwg.mxu0
    %965 = vmatpush.msra.mxu0 0.0
    %966 = vmatpush.msra.mxu0 0.0
    %967 = vmatpush.msra.mxu0 0.0
    %968 = vmatpush.msra.mxu0 0.0
    %969 = vmatpush.msra.mxu0 0.0
    %970 = vmatpush.msra.mxu0 0.0
    %971 = vmatpush.msra.mxu0 0.0
    %972 = vmatpush.msra.mxu0 0.0
    %973 = vmatpush.msra.mxu0 %v173
    %974 = vmatpush.msra.mxu0 %v172
    %975 = vmatpush.msra.mxu0 %v171
    %976 = vmatpush.msra.mxu0 %v170
    %977 = vmatpush.msra.mxu0 %v169
    %978 = vmatpush.msra.mxu0 %v168
    %979 = vmatpush.msra.mxu0 %v167
    %980 = vmatpush.msra.mxu0 %v166
    %981 = vmatmul.f32.gmra.mxu0 %v923
    %v982 = vpop.f32.mrf.mxu0
    %v983 = vadd.f32 %v220, %v982
    %984 = vdwg.mxu0
    %v986 = vrot.slane %v943, 4
    %v988 = vadd.f32 %v86, %v986
    %v989 = vxor.u32 %v988, 2147483648
    %v990 = vmul.f32 %v989, 1.442695
    %v991 = vpow.pop %v990
    %v992 = vadd.f32 %v991, 1.0
    %v993 = vrcp.pop %v992
    %v994 = vmul.f32 %v992, %v993
    %v995 = vsub.f32 1.0, %v994
    %v996 = vmul.f32 %v993, %v995
    %v997 = vadd.f32 %v993, %v996
    %vm998 = vweird.f32 %v992
    %vm999 = vweird.f32 %v993
    %vm1000 = vmor %vm998, %vm999
    %v1001 = vsel %vm1000, %v993, %v997
    %v1002 = vand.u32 2147483647, %v992
    %vm1003 = vcmp.eq.f32.partialorder %v1002, 8.507059e+37
    %v1004 = vand.u32 %v992, 2147483648
    %v1005 = vor.u32 1.1754944e-38, %v1004
    %v1006 = vsel %vm1003, %v1005, %v1001
    %v1007 = vmul.f32 1.0, %v1006
    %v1009 = vrot.slane %v963, 4
    %v1011 = vadd.f32 %v117, %v1009
    %v1012 = vxor.u32 %v1011, 2147483648
    %v1013 = vmul.f32 %v1012, 1.442695
    %v1014 = vpow.pop %v1013
    %v1015 = vadd.f32 %v1014, 1.0
    %v1016 = vrcp.pop %v1015
    %v1017 = vmul.f32 %v1015, %v1016
    %v1018 = vsub.f32 1.0, %v1017
    %v1019 = vmul.f32 %v1016, %v1018
    %v1020 = vadd.f32 %v1016, %v1019
    %vm1021 = vweird.f32 %v1015
    %vm1022 = vweird.f32 %v1016
    %vm1023 = vmor %vm1021, %vm1022
    %v1024 = vsel %vm1023, %v1016, %v1020
    %v1025 = vand.u32 2147483647, %v1015
    %vm1026 = vcmp.eq.f32.partialorder %v1025, 8.507059e+37
    %v1027 = vand.u32 %v1015, 2147483648
    %v1028 = vor.u32 1.1754944e-38, %v1027
    %v1029 = vsel %vm1026, %v1028, %v1024
    %v1030 = vmul.f32 1.0, %v1029
    %v1032 = vrot.slane %v983, 4
    %v1034 = vmul.f32 %v1007, %v1032
    %v1035 = vadd.f32 %v148, %v1034
    %v1036 = vtanh.pop %v1035
    %v1037 = vsub.f32 1.0, %v1030
    %v1038 = vmul.f32 %v1037, %v1036
    %v1039 = vrot.slane %v915, 6
    %v1041 = vmul.f32 %v1030, %v1039
    %v1042 = vadd.f32 %v1038, %v1041
    %1043 = vst.msk [vmem:[#allocation2 + $0x8] sm:$0x30] %vm544, %v1042
    %1045 = vrot.lane.b32.xlu0 %v1042, 96
    %v1046 = vpop.permute.xlu0 %1045
    %1048 = vst.msk [vmem:[#allocation3 - $0x2] sm:$0x30] %vm544, %v1046
    %v1049 = vrot.slane %v1042, 4
    %v1050 = vsel %vm175, %v1049, 0
    %1052 = vmatpush.msra.mxu0 0.0
    %1053 = vmatpush.msra.mxu0 0.0
    %1054 = vmatpush.msra.mxu0 0.0
    %1055 = vmatpush.msra.mxu0 0.0
    %1056 = vmatpush.msra.mxu0 0.0
    %1057 = vmatpush.msra.mxu0 0.0
    %1058 = vmatpush.msra.mxu0 0.0
    %1059 = vmatpush.msra.mxu0 0.0
    %1060 = vmatpush.msra.mxu0 %v157
    %1061 = vmatpush.msra.mxu0 %v156
    %1062 = vmatpush.msra.mxu0 %v155
    %1063 = vmatpush.msra.mxu0 %v154
    %1064 = vmatpush.msra.mxu0 %v153
    %1065 = vmatpush.msra.mxu0 %v152
    %1066 = vmatpush.msra.mxu0 %v151
    %1067 = vmatpush.msra.mxu0 %v150
    %1068 = vmatmul.f32.gmra.mxu0 %v1050
    %v1069 = vpop.f32.mrf.mxu0
    %v1070 = vadd.f32 0.0, %v1069
    %1071 = vdwg.mxu0
    %1072 = vmatpush.msra.mxu0 0.0
    %1073 = vmatpush.msra.mxu0 0.0
    %1074 = vmatpush.msra.mxu0 0.0
    %1075 = vmatpush.msra.mxu0 0.0
    %1076 = vmatpush.msra.mxu0 0.0
    %1077 = vmatpush.msra.mxu0 0.0
    %1078 = vmatpush.msra.mxu0 0.0
    %1079 = vmatpush.msra.mxu0 0.0
    %1080 = vmatpush.msra.mxu0 %v165
    %1081 = vmatpush.msra.mxu0 %v164
    %1082 = vmatpush.msra.mxu0 %v163
    %1083 = vmatpush.msra.mxu0 %v162
    %1084 = vmatpush.msra.mxu0 %v161
    %1085 = vmatpush.msra.mxu0 %v160
    %1086 = vmatpush.msra.mxu0 %v159
    %1087 = vmatpush.msra.mxu0 %v158
    %1088 = vmatmul.f32.gmra.mxu0 %v1050
    %v1089 = vpop.f32.mrf.mxu0
    %v1090 = vadd.f32 0.0, %v1089
    %1091 = vdwg.mxu0
    %1092 = vmatpush.msra.mxu0 0.0
    %1093 = vmatpush.msra.mxu0 0.0
    %1094 = vmatpush.msra.mxu0 0.0
    %1095 = vmatpush.msra.mxu0 0.0
    %1096 = vmatpush.msra.mxu0 0.0
    %1097 = vmatpush.msra.mxu0 0.0
    %1098 = vmatpush.msra.mxu0 0.0
    %1099 = vmatpush.msra.mxu0 0.0
    %1100 = vmatpush.msra.mxu0 %v173
    %1101 = vmatpush.msra.mxu0 %v172
    %1102 = vmatpush.msra.mxu0 %v171
    %1103 = vmatpush.msra.mxu0 %v170
    %1104 = vmatpush.msra.mxu0 %v169
    %1105 = vmatpush.msra.mxu0 %v168
    %1106 = vmatpush.msra.mxu0 %v167
    %1107 = vmatpush.msra.mxu0 %v166
    %1108 = vmatmul.f32.gmra.mxu0 %v1050
    %v1109 = vpop.f32.mrf.mxu0
    %v1110 = vadd.f32 %v220, %v1109
    %1111 = vdwg.mxu0
    %v1113 = vrot.slane %v1070, 2
    %v1115 = vadd.f32 %v86, %v1113
    %v1116 = vxor.u32 %v1115, 2147483648
    %v1117 = vmul.f32 %v1116, 1.442695
    %v1118 = vpow.pop %v1117
    %v1119 = vadd.f32 %v1118, 1.0
    %v1120 = vrcp.pop %v1119
    %v1121 = vmul.f32 %v1119, %v1120
    %v1122 = vsub.f32 1.0, %v1121
    %v1123 = vmul.f32 %v1120, %v1122
    %v1124 = vadd.f32 %v1120, %v1123
    %vm1125 = vweird.f32 %v1119
    %vm1126 = vweird.f32 %v1120
    %vm1127 = vmor %vm1125, %vm1126
    %v1128 = vsel %vm1127, %v1120, %v1124
    %v1129 = vand.u32 2147483647, %v1119
    %vm1130 = vcmp.eq.f32.partialorder %v1129, 8.507059e+37
    %v1131 = vand.u32 %v1119, 2147483648
    %v1132 = vor.u32 1.1754944e-38, %v1131
    %v1133 = vsel %vm1130, %v1132, %v1128
    %v1134 = vmul.f32 1.0, %v1133
    %v1136 = vrot.slane %v1090, 2
    %v1138 = vadd.f32 %v117, %v1136
    %v1139 = vxor.u32 %v1138, 2147483648
    %v1140 = vmul.f32 %v1139, 1.442695
    %v1141 = vpow.pop %v1140
    %v1142 = vadd.f32 %v1141, 1.0
    %v1143 = vrcp.pop %v1142
    %v1144 = vmul.f32 %v1142, %v1143
    %v1145 = vsub.f32 1.0, %v1144
    %v1146 = vmul.f32 %v1143, %v1145
    %v1147 = vadd.f32 %v1143, %v1146
    %vm1148 = vweird.f32 %v1142
    %vm1149 = vweird.f32 %v1143
    %vm1150 = vmor %vm1148, %vm1149
    %v1151 = vsel %vm1150, %v1143, %v1147
    %v1152 = vand.u32 2147483647, %v1142
    %vm1153 = vcmp.eq.f32.partialorder %v1152, 8.507059e+37
    %v1154 = vand.u32 %v1142, 2147483648
    %v1155 = vor.u32 1.1754944e-38, %v1154
    %v1156 = vsel %vm1153, %v1155, %v1151
    %v1157 = vmul.f32 1.0, %v1156
    %v1159 = vrot.slane %v1110, 2
    %v1161 = vmul.f32 %v1134, %v1159
    %v1162 = vadd.f32 %v148, %v1161
    %v1163 = vtanh.pop %v1162
    %v1164 = vsub.f32 1.0, %v1157
    %v1165 = vmul.f32 %v1164, %v1163
    %v1166 = vrot.slane %v1042, 6
    %v1168 = vmul.f32 %v1157, %v1166
    %v1169 = vadd.f32 %v1165, %v1168
    %1170 = vst.msk [vmem:[#allocation2 + $0x8] sm:$0xc0] %vm672, %v1169
    %1172 = vrot.lane.b32.xlu0 %v1169, 96
    %v1173 = vpop.permute.xlu0 %1172
    %1175 = vst.msk [vmem:[#allocation3 - $0x6] sm:$0xc0] %vm672, %v1173
    %v1176 = vld [vmem:[#allocation2] sm:$0xff]
    %v1177 = vld [vmem:[#allocation2 + $0x8] sm:$0xff]
    %v1178 = vld [vmem:[%s11] sm:$0xff]
    %v1179 = vld [vmem:[%s11 + $0x8] sm:$0xff]
    %v1180 = vld [vmem:[%s11 + $0x10] sm:$0xff]
    %v1181 = vld [vmem:[%s11 + $0x18] sm:$0xff]
    %v1182 = vld [vmem:[#allocation3] sm:$0xff]
    %v1183 = vld [vmem:[#allocation3 + $0x8] sm:$0xff]
    %v1184 = vld [vmem:[%s12] sm:$0xff]
    %v1185 = vld [vmem:[%s12 + $0x8] sm:$0xff]
    %v1186 = vld [vmem:[%s12 + $0x10] sm:$0xff]
    %v1187 = vld [vmem:[%s12 + $0x18] sm:$0xff]
    %v1189 = vsel %vm58, %v1182, 0
    %v1192 = vsel %vm58, %v1183, 0
    %1194 = vmatpush.msra.mxu0 0.0
    %1195 = vmatpush.msra.mxu0 0.0
    %1196 = vmatpush.msra.mxu0 0.0
    %1197 = vmatpush.msra.mxu0 0.0
    %1198 = vmatpush.msra.mxu0 0.0
    %1199 = vmatpush.msra.mxu0 0.0
    %1200 = vmatpush.msra.mxu0 0.0
    %1201 = vmatpush.msra.mxu0 0.0
    %1202 = vmatpush.msra.mxu0 0.0
    %1203 = vmatpush.msra.mxu0 0.0
    %1204 = vmatpush.msra.mxu0 0.0
    %1205 = vmatpush.msra.mxu0 0.0
    %1206 = vmatpush.msra.mxu0 %v1187
    %1207 = vmatpush.msra.mxu0 %v1186
    %1208 = vmatpush.msra.mxu0 %v1185
    %1209 = vmatpush.msra.mxu0 %v1184
    %1210 = vmatmul.f32.gmra.mxu0 %v1189
    %v1211 = vpop.f32.mrf.mxu0
    %v1212 = vadd.f32 0.0, %v1211
    %1213 = vmatmul.f32.gmra.mxu0 %v1192
    %v1214 = vpop.f32.mrf.mxu0
    %v1215 = vadd.f32 0.0, %v1214
    %1216 = vdwg.mxu0
    %v1218 = vsel %vm58, %v1176, 0
    %v1221 = vsel %vm58, %v1177, 0
    %1223 = vmatpush.msra.mxu0 0.0
    %1224 = vmatpush.msra.mxu0 0.0
    %1225 = vmatpush.msra.mxu0 0.0
    %1226 = vmatpush.msra.mxu0 0.0
    %1227 = vmatpush.msra.mxu0 0.0
    %1228 = vmatpush.msra.mxu0 0.0
    %1229 = vmatpush.msra.mxu0 0.0
    %1230 = vmatpush.msra.mxu0 0.0
    %1231 = vmatpush.msra.mxu0 0.0
    %1232 = vmatpush.msra.mxu0 0.0
    %1233 = vmatpush.msra.mxu0 0.0
    %1234 = vmatpush.msra.mxu0 0.0
    %1235 = vmatpush.msra.mxu0 %v1181
    %1236 = vmatpush.msra.mxu0 %v1180
    %1237 = vmatpush.msra.mxu0 %v1179
    %1238 = vmatpush.msra.mxu0 %v1178
    %1239 = vmatmul.f32.gmra.mxu0 %v1218
    %v1240 = vpop.f32.mrf.mxu0
    %v1241 = vadd.f32 %v1212, %v1240
    %1242 = vmatmul.f32.gmra.mxu0 %v1221
    %v1243 = vpop.f32.mrf.mxu0
    %v1244 = vadd.f32 %v1215, %v1243
    %1245 = vdwg.mxu0
    %v1246 = vld [vmem:[%s13] sm:$0x1]
    %v1248 = vperm.slane %v1246, 0
    %v1250 = vadd.f32 %v1241, %v1248
    %v1251 = vadd.f32 %v1244, %v1248
    %vm1252 = vcmask 64512
    %1253 = vst.msk [vmem:[#allocation4] sm:$0xff] %vm1252, %v1250
    %1254 = vst.msk [vmem:[#allocation4 + $0x8] sm:$0xff] %vm1252, %v1251
    // Predicated region
    $region58: #{bidirect_gru_pallas.1} parent=1 // pred_check
      _
    $region59: #{bidirect_gru_pallas.1} parent=1 // pred_check_branch
      %1256 = sbr.rel (0) target = $region61
    $region60: #{bidirect_gru_pallas.1} parent=1 // pred_region
      %1258 = vsyncadd [#allocation5], 0
      %s1259 = sshll.u32 [#allocation4], 4
      %s1260 = int_to_ptr.vmem [resolvable:$true] %s1259
      %s1261 = sshll.u32 %s14, 4
      %s1262 = int_to_ptr.hbm [resolvable:$true] %s1261
      %1267 = dma.vmem_to_hbm [thread:$0]  %s1260, 256, %s1262, [#allocation5], 128, 128, 8
    $region61: #{bidirect_gru_pallas.1} parent=1 // pred_fallthru
      _
    // Predicated region
    $region62: #{bidirect_gru_pallas.1} parent=1 // pred_check
      _
    $region63: #{bidirect_gru_pallas.1} parent=1 // pred_check_branch
      %1269 = sbr.rel (0) target = $region65
    $region64: #{bidirect_gru_pallas.1} parent=1 // pred_region
      %1271 = dma.done [#allocation5], 256
    $region65: #{bidirect_gru_pallas.1} parent=1 // pred_fallthru
      _
    %1272 = vsyncpa [#allocation5], 1

</llo_original>
